<compile_context>
chip_gen: v7x
topology: tpu7x:2x2x1
jax: 0.10.0
libtpu: 0.0.40
codegen_flags: <defaults>
</compile_context>

<pallas_src>
import functools

import numpy as np
import jax
import jax.numpy as jnp
from jax.experimental import pallas as pl
from jax.experimental.pallas import tpu as pltpu


# ----------------------------------------------------------------------------
# Pallas kernel: ALL DDIM steps fused (epsilon model + folded update), with the
# pixel tile and weights resident in VMEM across the whole trajectory.
# ----------------------------------------------------------------------------
def ddim_fused_kernel(coef_ref, x_ref, w1t_ref, w2t_ref, bias_ref, temb_ref,
                      out_ref, *, use_bf16=False):
    # coef_ref  (SMEM, f32[S]):        a_s = sqrt(abar_prev)/sqrt(abar_t)
    # x_ref     (VMEM, f32[Cp, tm]):   sublane-packed, lane-dense pixel tile
    # w1t_ref   (VMEM, f32[Hp, Cp]):   block-diagonal first-layer weight
    # w2t_ref   (VMEM, f32[S, Cp, Hp]): per-step b_s-folded second-layer weight
    # bias_ref  (VMEM, f32[S, Cp, 1]): per-step b_s-folded output bias
    # temb_ref  (VMEM, f32[S, Hp, 1]): per-step (time embedding + b1), duplicated
    nsteps = temb_ref.shape[0]                       # static (compile-time)

    x = x_ref[...].astype(jnp.float32)               # (Cp, tm)
    w1t = w1t_ref[...]                                # (Hp, Cp), loop-invariant
    if use_bf16:
        w1t = w1t.astype(jnp.bfloat16)

    def step(s, x):
        rhs = x.astype(jnp.bfloat16) if use_bf16 else x
        h = jnp.dot(w1t, rhs, preferred_element_type=jnp.float32)     # (Hp, tm) MXU
        h = jnp.tanh(h + temb_ref[s])                                  # EUP (+ lane bcast)
        w2t_s = w2t_ref[s]                                             # (Cp, Hp)
        if use_bf16:
            w2t_s = w2t_s.astype(jnp.bfloat16)
            h = h.astype(jnp.bfloat16)
        upd = jnp.dot(w2t_s, h, preferred_element_type=jnp.float32)    # (Cp, tm) MXU
        # b_s is pre-folded into w2t_s / bias_s -> only 1 mul + 2 adds per elem.
        return coef_ref[s] * x + upd + bias_ref[s]

    if nsteps <= 16:
        # Small S: static unroll keeps everything visible to the LLO scheduler.
        for s in range(nsteps):
            x = step(s, x)
    else:
        # Large S: bound live ranges / code size; dynamic first-axis ref reads.
        x = jax.lax.fori_loop(0, nsteps, step, x, unroll=4)

    out_ref[...] = x.astype(out_ref.dtype)


# ----------------------------------------------------------------------------
# Generation-aware tiling helpers.
# ----------------------------------------------------------------------------
def _vmem_budget_and_cores():
    """(requested scoped-VMEM limit in bytes, #TensorCores to feed)."""
    kind = ""
    try:
        kind = jax.devices()[0].device_kind.lower()
    except Exception:
        pass
    is_v7 = "v7" in kind
    phys = None
    try:
        phys = int(pltpu.get_tpu_info().vmem_capacity_bytes)
    except Exception:
        phys = None
    if phys is None:
        phys = (64 if is_v7 else 128) * 1024 * 1024
    if is_v7:
        phys = min(phys, 64 * 1024 * 1024)            # 64 MiB per TC on v7x
    n_cores = 2 if is_v7 else 1                        # v5e/v6e: 1 TC per chip
    # Request half the physical VMEM as the scoped limit (headroom for Mosaic
    # internal scratch): v5e/v6e -> 64 MiB, v7x -> 32 MiB.
    return phys // 2, n_cores


def _packing_factor(C, M):
    """Pack P pixel groups onto sublanes so P*C fills the 8 f32 sublanes."""
    if C >= 8 or 8 % C != 0:
        return 1
    P = 8 // C
    while P > 1 and M % (P * 128) != 0:
        P //= 2
    return max(P, 1)


def _choose_tiling(M, Cp, n_cores, vmem_limit_bytes, weight_bytes):
    """Pick (tm, n_tiles): one tile per TensorCore, capped by the VMEM budget."""
    if M % 128 != 0:
        return M, 1           # degenerate small case: single (lane-masked) block
    # Budget for the double-buffered x in + out tiles (~4 buffers of Cp*tm f32).
    budget = vmem_limit_bytes - 2 * weight_bytes - (2 << 20)
    budget = max(budget, 4 * Cp * 128 * 4)
    tm_cap = max((budget // (4 * Cp * 4)) // 128 * 128, 128)
    # One tile per core.  Extra grid tiles are a SERIAL loop on 1-TC chips and
    # only add ~0.35us/step pipeline overhead, so don't split for v5e/v6e.
    if n_cores > 1 and M >= n_cores * 128 and (M // 128) % n_cores == 0:
        n_tiles = n_cores
    else:
        n_tiles = 1
    tm = M // n_tiles
    while tm > tm_cap and tm % 256 == 0:               # split only if over budget
        tm //= 2
    return tm, M // tm


def ddim_sample_fused(x_pk, coef_a, w1t_blk, w2t_fold, bias_fold, temb_blk,
                      use_bf16=False):
    """x_pk: (Cp, Mp) sublane-packed channels, pixels on lanes."""
    Cp, Mp = x_pk.shape
    Hp = w1t_blk.shape[0]
    S = coef_a.shape[0]
    vmem_limit, n_cores = _vmem_budget_and_cores()
    weight_bytes = 4 * (Hp * Cp + S * Cp * Hp + S * Cp + S * Hp)
    tm, n_tiles = _choose_tiling(Mp, Cp, n_cores, vmem_limit, weight_bytes)

    kernel = functools.partial(ddim_fused_kernel, use_bf16=use_bf16)
    return pl.pallas_call(
        kernel,
        out_shape=jax.ShapeDtypeStruct((Cp, Mp), x_pk.dtype),
        grid=(n_tiles,),
        in_specs=[
            pl.BlockSpec(memory_space=pltpu.MemorySpace.SMEM),    # coef_a (S,)
            pl.BlockSpec((Cp, tm), lambda i: (0, i)),             # x tile (lane-dense)
            pl.BlockSpec((Hp, Cp), lambda i: (0, 0)),             # w1t_blk (resident)
            pl.BlockSpec((S, Cp, Hp), lambda i: (0, 0, 0)),       # b_s-folded w2t
            pl.BlockSpec((S, Cp, 1), lambda i: (0, 0, 0)),        # b_s-folded bias
            pl.BlockSpec((S, Hp, 1), lambda i: (0, 0, 0)),        # temb + b1
        ],
        out_specs=pl.BlockSpec((Cp, tm), lambda i: (0, i)),
        input_output_aliases={1: 0},                              # update x in place
        compiler_params=pltpu.CompilerParams(
            dimension_semantics=("parallel",),
            vmem_limit_bytes=int(vmem_limit),
        ),
    )(coef_a, x_pk, w1t_blk, w2t_fold, bias_fold, temb_blk)


# ----------------------------------------------------------------------------
# DDIM wrapper (schedule buffers, time embedding, host-side folding, layout).
# ----------------------------------------------------------------------------
def linear_beta_scheduler(T, betas=None):
    if betas is not None:
        return jnp.asarray(betas, dtype=jnp.float32)
    return jnp.linspace(1e-4, 0.02, T, dtype=jnp.float32)


class DDIMPallas:
    def __init__(self, timesteps, channels, hidden, key,
                 scheduler=linear_beta_scheduler, betas=None, use_bf16_matmul=False):
        assert hidden % 2 == 0, "sinusoidal time embedding assumes even hidden width"
        self.T = timesteps
        self.use_bf16 = use_bf16_matmul
        beta_t = scheduler(timesteps, betas)
        alpha_t = 1.0 - beta_t
        alpha_t_bar = jnp.cumprod(alpha_t)
        self.sqrt_alpha_cumprod = jnp.sqrt(alpha_t_bar)
        self.sqrt_one_minus_alpha_cumprod = jnp.sqrt(1.0 - alpha_t_bar)

        # Deterministic synthetic epsilon-model parameters (per-pixel MLP).
        k1, k2, k3, k4 = jax.random.split(key, 4)
        self.C, self.Hd = channels, hidden
        self.w1 = jax.random.normal(k1, (channels, hidden), jnp.float32) * 0.2
        self.b1 = jax.random.normal(k3, (hidden,), jnp.float32) * 0.1
        self.w2 = jax.random.normal(k2, (hidden, channels), jnp.float32) * 0.2
        self.b2 = jax.random.normal(k4, (channels,), jnp.float32) * 0.1

        # Kernel-layout views (channels/hidden on sublanes, pixels on lanes).
        self.w1t = jnp.transpose(self.w1)            # (Hd, C)
        self.w2t = jnp.transpose(self.w2)            # (C, Hd)

        self._forward_jit = jax.jit(self._forward_impl)

    # -- synthetic epsilon model pieces ---------------------------------------
    def time_embedding(self, t_scalar):
        half = self.Hd // 2
        freqs = jnp.exp(-np.log(10000.0) * jnp.arange(half, dtype=jnp.float32) / half)
        ang = jnp.float32(t_scalar) * freqs
        return jnp.concatenate([jnp.sin(ang), jnp.cos(ang)])        # (Hd,)

    # -- schedule / per-step constants ----------------------------------------
    def _step_schedule(self, steps):
        # Note: range(0, T, T//steps) can yield more than `steps` timesteps when
        # steps does not divide T -- inherited from the PyTorch module.
        time_steps = np.asarray(list(range(0, self.T, self.T // steps)))
        time_steps_prev = np.concatenate([[0], time_steps[:-1]])
        return list(zip(reversed(time_steps), reversed(time_steps_prev)))

    def _step_constants(self, schedule):
        sa = self.sqrt_alpha_cumprod
        s1 = self.sqrt_one_minus_alpha_cumprod
        a_l, b_l, t_l = [], [], []
        for ts, ts_prev in schedule:
            a_l.append(sa[ts_prev] / sa[ts])
            b_l.append(s1[ts_prev] - sa[ts_prev] * s1[ts] / sa[ts])
            t_l.append(self.time_embedding(ts))
        coef_a = jnp.stack(a_l).astype(jnp.float32)                  # (S,)
        coef_b = jnp.stack(b_l).astype(jnp.float32)                  # (S,)
        temb = jnp.stack(t_l).astype(jnp.float32)                    # (S, Hd)
        return coef_a, coef_b, temb

    # -- forward (Pallas) ------------------------------------------------------
    def _forward_impl(self, x_t, coef_a, coef_b, temb):
        B, C, H, W = x_t.shape
        M = B * H * W
        P = _packing_factor(C, M)                 # pixel groups packed on sublanes
        Cp, Hp, Mp = P * C, P * self.Hd, M // P

        # Lane-dense (channels, pixels) layout, then sublane-pack P pixel groups.
        x_cm = jnp.transpose(x_t, (1, 0, 2, 3)).reshape(C, M)
        x_pk = x_cm.reshape(C, P, Mp).transpose(1, 0, 2).reshape(Cp, Mp)

        # Block-diagonal weights so the packed groups stay independent.
        eye_p = jnp.eye(P, dtype=jnp.float32)
        w1t_blk = jnp.kron(eye_p, self.w1t)                            # (Hp, Cp)
        w2t_blk = jnp.kron(eye_p, self.w2t)                            # (Cp, Hp)
        b2_blk = jnp.tile(self.b2, P)                                  # (Cp,)

        # Fold the per-step DDIM scalar b_s into the second layer (host side).
        w2t_fold = coef_b[:, None, None] * w2t_blk[None, :, :]         # (S, Cp, Hp)
        bias_fold = (coef_b[:, None] * b2_blk[None, :])[..., None]     # (S, Cp, 1)
        temb_blk = jnp.tile(temb + self.b1, (1, P))[..., None]         # (S, Hp, 1)

        y_pk = ddim_sample_fused(x_pk, coef_a, w1t_blk, w2t_fold,
                                 bias_fold, temb_blk, self.use_bf16)

        y_cm = y_pk.reshape(P, C, Mp).transpose(1, 0, 2).reshape(C, M)
        return jnp.transpose(y_cm.reshape(C, B, H, W), (1, 0, 2, 3))

    def forward(self, x_t, steps=1):
        """x_t: (B, C, H, W) NCHW, same as the PyTorch module."""
        schedule = self._step_schedule(steps)
        coef_a, coef_b, temb = self._step_constants(schedule)
        return self._forward_jit(x_t, coef_a, coef_b, temb)

    # -- pure-JAX reference matching the PyTorch semantics ---------------------
    def forward_ref(self, x_t, steps=1):
        B, C, H, W = x_t.shape
        hi = jax.lax.Precision.HIGHEST
        x_flat = jnp.transpose(x_t, (0, 2, 3, 1)).reshape(B * H * W, C)
        for ts, ts_prev in self._step_schedule(steps):
            temb = self.time_embedding(ts)
            h = jnp.tanh(jnp.dot(x_flat, self.w1, precision=hi) + temb + self.b1)
            eps = jnp.dot(h, self.w2, precision=hi) + self.b2
            sa_t = self.sqrt_alpha_cumprod[ts]
            s1_t = self.sqrt_one_minus_alpha_cumprod[ts]
            sa_p = self.sqrt_alpha_cumprod[ts_prev]
            s1_p = self.sqrt_one_minus_alpha_cumprod[ts_prev]
            x0 = (x_flat - eps * s1_t) / sa_t
            x_flat = sa_p * x0 + s1_p * eps
        return x_flat.reshape(B, H, W, C).transpose(0, 3, 1, 2)


if __name__ == "__main__":
    key = jax.random.PRNGKey(0)
    k_x, k_params = jax.random.split(key)

    B, C, H, W = 2, 4, 16, 16        # 512 pixels -> packed (8, 256) working state
    Hd = 32                          # hidden width of synthetic epsilon model
    T = 100                          # diffusion timesteps
    steps = 5                        # DDIM sampling steps (all fused in one kernel)

    x_T = jax.random.normal(k_x, (B, C, H, W), jnp.float32)

    sampler = DDIMPallas(T, C, Hd, k_params)

    out = jax.block_until_ready(sampler.forward(x_T, steps=steps))
    ref = sampler.forward_ref(x_T, steps=steps)
    # Tolerance leaves headroom for MXU multi-pass f32 matmul rounding vs. the
    # exact (Precision.HIGHEST) reference over the fused multi-step trajectory;
    # any real bug produces errors orders of magnitude larger.
    np.testing.assert_allclose(np.asarray(out), np.asarray(ref), rtol=2e-3, atol=2e-3)

    print("KERNEL_OK")
</pallas_src>

<mosaic_0001>
module attributes {stable_mosaic.version = 11 : i64} {
  func.func @ddim_fused_kernel(%arg0: i32, %arg1: memref<5xf32, #tpu.memory_space<smem>>, %arg2: memref<8x256xf32, #tpu.memory_space<vmem>>, %arg3: memref<64x8xf32, #tpu.memory_space<vmem>>, %arg4: memref<5x8x64xf32, #tpu.memory_space<vmem>>, %arg5: memref<5x8x1xf32, #tpu.memory_space<vmem>>, %arg6: memref<5x64x1xf32, #tpu.memory_space<vmem>>, %arg7: memref<8x256xf32, #tpu.memory_space<vmem>>) attributes {dimension_semantics = [#tpu.dimension_semantics<parallel>], iteration_bounds = array<i64: 1>, scalar_prefetch = 0 : i64, scratch_operands = 0 : i64, tpu.core_type = #tpu.core_type<tc>, window_params = [{transform_indices = @transform_0, window_bounds = array<i64: 5>}, {transform_indices = @transform_1, window_bounds = array<i64: 8, 256>}, {pipeline_mode = #tpu.pipeline_mode<synchronous>, transform_indices = @transform_2, window_bounds = array<i64: 64, 8>}, {pipeline_mode = #tpu.pipeline_mode<synchronous>, transform_indices = @transform_3, window_bounds = array<i64: 5, 8, 64>}, {pipeline_mode = #tpu.pipeline_mode<synchronous>, transform_indices = @transform_4, window_bounds = array<i64: 5, 8, 1>}, {pipeline_mode = #tpu.pipeline_mode<synchronous>, transform_indices = @transform_5, window_bounds = array<i64: 5, 64, 1>}, {transform_indices = @transform_6, window_bounds = array<i64: 8, 256>}]} {
    %c0 = arith.constant 0 : index
    %c0_0 = arith.constant 0 : index
    %0 = vector.load %arg2[%c0, %c0_0] : memref<8x256xf32, #tpu.memory_space<vmem>>, vector<8x256xf32>
    %c0_1 = arith.constant 0 : index
    %c0_2 = arith.constant 0 : index
    %1 = vector.load %arg3[%c0_1, %c0_2] : memref<64x8xf32, #tpu.memory_space<vmem>>, vector<64x8xf32>
    %cst = arith.constant dense<0.000000e+00> : vector<64x256xf32>
    %2 = tpu.matmul %1, %0, %cst {dimension_numbers = #tpu.dot_dimension_numbers<[1], [0], [0], [1], [0, 0, 1, 1], [], []>} : vector<64x8xf32>, vector<8x256xf32>, vector<64x256xf32> -> vector<64x256xf32>
    %c0_3 = arith.constant 0 : index
    %c0_4 = arith.constant 0 : index
    %c0_5 = arith.constant 0 : index
    %3 = vector.load %arg6[%c0_3, %c0_4, %c0_5] : memref<5x64x1xf32, #tpu.memory_space<vmem>>, vector<1x64x1xf32>
    %4 = vector.shape_cast %3 : vector<1x64x1xf32> to vector<64x1xf32>
    %5 = vector.broadcast %4 : vector<64x1xf32> to vector<64x256xf32>
    %6 = arith.addf %2, %5 : vector<64x256xf32>
    %7 = math.tanh %6 : vector<64x256xf32>
    %c0_6 = arith.constant 0 : index
    %c0_7 = arith.constant 0 : index
    %c0_8 = arith.constant 0 : index
    %8 = vector.load %arg4[%c0_6, %c0_7, %c0_8] : memref<5x8x64xf32, #tpu.memory_space<vmem>>, vector<1x8x64xf32>
    %9 = vector.shape_cast %8 : vector<1x8x64xf32> to vector<8x64xf32>
    %cst_9 = arith.constant dense<0.000000e+00> : vector<8x256xf32>
    %10 = tpu.matmul %9, %7, %cst_9 {dimension_numbers = #tpu.dot_dimension_numbers<[1], [0], [0], [1], [0, 0, 1, 1], [], []>} : vector<8x64xf32>, vector<64x256xf32>, vector<8x256xf32> -> vector<8x256xf32>
    %c0_10 = arith.constant 0 : index
    %11 = memref.load %arg1[%c0_10] : memref<5xf32, #tpu.memory_space<smem>>
    %12 = vector.broadcast %11 : f32 to vector<8x256xf32>
    %13 = arith.mulf %12, %0 : vector<8x256xf32>
    %14 = arith.addf %13, %10 : vector<8x256xf32>
    %c0_11 = arith.constant 0 : index
    %c0_12 = arith.constant 0 : index
    %c0_13 = arith.constant 0 : index
    %15 = vector.load %arg5[%c0_11, %c0_12, %c0_13] : memref<5x8x1xf32, #tpu.memory_space<vmem>>, vector<1x8x1xf32>
    %16 = vector.shape_cast %15 : vector<1x8x1xf32> to vector<8x1xf32>
    %17 = vector.broadcast %16 : vector<8x1xf32> to vector<8x256xf32>
    %18 = arith.addf %14, %17 : vector<8x256xf32>
    %cst_14 = arith.constant dense<0.000000e+00> : vector<64x256xf32>
    %19 = tpu.matmul %1, %18, %cst_14 {dimension_numbers = #tpu.dot_dimension_numbers<[1], [0], [0], [1], [0, 0, 1, 1], [], []>} : vector<64x8xf32>, vector<8x256xf32>, vector<64x256xf32> -> vector<64x256xf32>
    %c1 = arith.constant 1 : index
    %c0_15 = arith.constant 0 : index
    %c0_16 = arith.constant 0 : index
    %20 = vector.load %arg6[%c1, %c0_15, %c0_16] : memref<5x64x1xf32, #tpu.memory_space<vmem>>, vector<1x64x1xf32>
    %21 = vector.shape_cast %20 : vector<1x64x1xf32> to vector<64x1xf32>
    %22 = vector.broadcast %21 : vector<64x1xf32> to vector<64x256xf32>
    %23 = arith.addf %19, %22 : vector<64x256xf32>
    %24 = math.tanh %23 : vector<64x256xf32>
    %c1_17 = arith.constant 1 : index
    %c0_18 = arith.constant 0 : index
    %c0_19 = arith.constant 0 : index
    %25 = vector.load %arg4[%c1_17, %c0_18, %c0_19] : memref<5x8x64xf32, #tpu.memory_space<vmem>>, vector<1x8x64xf32>
    %26 = vector.shape_cast %25 : vector<1x8x64xf32> to vector<8x64xf32>
    %cst_20 = arith.constant dense<0.000000e+00> : vector<8x256xf32>
    %27 = tpu.matmul %26, %24, %cst_20 {dimension_numbers = #tpu.dot_dimension_numbers<[1], [0], [0], [1], [0, 0, 1, 1], [], []>} : vector<8x64xf32>, vector<64x256xf32>, vector<8x256xf32> -> vector<8x256xf32>
    %c1_21 = arith.constant 1 : index
    %28 = memref.load %arg1[%c1_21] : memref<5xf32, #tpu.memory_space<smem>>
    %29 = vector.broadcast %28 : f32 to vector<8x256xf32>
    %30 = arith.mulf %29, %18 : vector<8x256xf32>
    %31 = arith.addf %30, %27 : vector<8x256xf32>
    %c1_22 = arith.constant 1 : index
    %c0_23 = arith.constant 0 : index
    %c0_24 = arith.constant 0 : index
    %32 = vector.load %arg5[%c1_22, %c0_23, %c0_24] : memref<5x8x1xf32, #tpu.memory_space<vmem>>, vector<1x8x1xf32>
    %33 = vector.shape_cast %32 : vector<1x8x1xf32> to vector<8x1xf32>
    %34 = vector.broadcast %33 : vector<8x1xf32> to vector<8x256xf32>
    %35 = arith.addf %31, %34 : vector<8x256xf32>
    %cst_25 = arith.constant dense<0.000000e+00> : vector<64x256xf32>
    %36 = tpu.matmul %1, %35, %cst_25 {dimension_numbers = #tpu.dot_dimension_numbers<[1], [0], [0], [1], [0, 0, 1, 1], [], []>} : vector<64x8xf32>, vector<8x256xf32>, vector<64x256xf32> -> vector<64x256xf32>
    %c2 = arith.constant 2 : index
    %c0_26 = arith.constant 0 : index
    %c0_27 = arith.constant 0 : index
    %37 = vector.load %arg6[%c2, %c0_26, %c0_27] : memref<5x64x1xf32, #tpu.memory_space<vmem>>, vector<1x64x1xf32>
    %38 = vector.shape_cast %37 : vector<1x64x1xf32> to vector<64x1xf32>
    %39 = vector.broadcast %38 : vector<64x1xf32> to vector<64x256xf32>
    %40 = arith.addf %36, %39 : vector<64x256xf32>
    %41 = math.tanh %40 : vector<64x256xf32>
    %c2_28 = arith.constant 2 : index
    %c0_29 = arith.constant 0 : index
    %c0_30 = arith.constant 0 : index
    %42 = vector.load %arg4[%c2_28, %c0_29, %c0_30] : memref<5x8x64xf32, #tpu.memory_space<vmem>>, vector<1x8x64xf32>
    %43 = vector.shape_cast %42 : vector<1x8x64xf32> to vector<8x64xf32>
    %cst_31 = arith.constant dense<0.000000e+00> : vector<8x256xf32>
    %44 = tpu.matmul %43, %41, %cst_31 {dimension_numbers = #tpu.dot_dimension_numbers<[1], [0], [0], [1], [0, 0, 1, 1], [], []>} : vector<8x64xf32>, vector<64x256xf32>, vector<8x256xf32> -> vector<8x256xf32>
    %c2_32 = arith.constant 2 : index
    %45 = memref.load %arg1[%c2_32] : memref<5xf32, #tpu.memory_space<smem>>
    %46 = vector.broadcast %45 : f32 to vector<8x256xf32>
    %47 = arith.mulf %46, %35 : vector<8x256xf32>
    %48 = arith.addf %47, %44 : vector<8x256xf32>
    %c2_33 = arith.constant 2 : index
    %c0_34 = arith.constant 0 : index
    %c0_35 = arith.constant 0 : index
    %49 = vector.load %arg5[%c2_33, %c0_34, %c0_35] : memref<5x8x1xf32, #tpu.memory_space<vmem>>, vector<1x8x1xf32>
    %50 = vector.shape_cast %49 : vector<1x8x1xf32> to vector<8x1xf32>
    %51 = vector.broadcast %50 : vector<8x1xf32> to vector<8x256xf32>
    %52 = arith.addf %48, %51 : vector<8x256xf32>
    %cst_36 = arith.constant dense<0.000000e+00> : vector<64x256xf32>
    %53 = tpu.matmul %1, %52, %cst_36 {dimension_numbers = #tpu.dot_dimension_numbers<[1], [0], [0], [1], [0, 0, 1, 1], [], []>} : vector<64x8xf32>, vector<8x256xf32>, vector<64x256xf32> -> vector<64x256xf32>
    %c3 = arith.constant 3 : index
    %c0_37 = arith.constant 0 : index
    %c0_38 = arith.constant 0 : index
    %54 = vector.load %arg6[%c3, %c0_37, %c0_38] : memref<5x64x1xf32, #tpu.memory_space<vmem>>, vector<1x64x1xf32>
    %55 = vector.shape_cast %54 : vector<1x64x1xf32> to vector<64x1xf32>
    %56 = vector.broadcast %55 : vector<64x1xf32> to vector<64x256xf32>
    %57 = arith.addf %53, %56 : vector<64x256xf32>
    %58 = math.tanh %57 : vector<64x256xf32>
    %c3_39 = arith.constant 3 : index
    %c0_40 = arith.constant 0 : index
    %c0_41 = arith.constant 0 : index
    %59 = vector.load %arg4[%c3_39, %c0_40, %c0_41] : memref<5x8x64xf32, #tpu.memory_space<vmem>>, vector<1x8x64xf32>
    %60 = vector.shape_cast %59 : vector<1x8x64xf32> to vector<8x64xf32>
    %cst_42 = arith.constant dense<0.000000e+00> : vector<8x256xf32>
    %61 = tpu.matmul %60, %58, %cst_42 {dimension_numbers = #tpu.dot_dimension_numbers<[1], [0], [0], [1], [0, 0, 1, 1], [], []>} : vector<8x64xf32>, vector<64x256xf32>, vector<8x256xf32> -> vector<8x256xf32>
    %c3_43 = arith.constant 3 : index
    %62 = memref.load %arg1[%c3_43] : memref<5xf32, #tpu.memory_space<smem>>
    %63 = vector.broadcast %62 : f32 to vector<8x256xf32>
    %64 = arith.mulf %63, %52 : vector<8x256xf32>
    %65 = arith.addf %64, %61 : vector<8x256xf32>
    %c3_44 = arith.constant 3 : index
    %c0_45 = arith.constant 0 : index
    %c0_46 = arith.constant 0 : index
    %66 = vector.load %arg5[%c3_44, %c0_45, %c0_46] : memref<5x8x1xf32, #tpu.memory_space<vmem>>, vector<1x8x1xf32>
    %67 = vector.shape_cast %66 : vector<1x8x1xf32> to vector<8x1xf32>
    %68 = vector.broadcast %67 : vector<8x1xf32> to vector<8x256xf32>
    %69 = arith.addf %65, %68 : vector<8x256xf32>
    %cst_47 = arith.constant dense<0.000000e+00> : vector<64x256xf32>
    %70 = tpu.matmul %1, %69, %cst_47 {dimension_numbers = #tpu.dot_dimension_numbers<[1], [0], [0], [1], [0, 0, 1, 1], [], []>} : vector<64x8xf32>, vector<8x256xf32>, vector<64x256xf32> -> vector<64x256xf32>
    %c4 = arith.constant 4 : index
    %c0_48 = arith.constant 0 : index
    %c0_49 = arith.constant 0 : index
    %71 = vector.load %arg6[%c4, %c0_48, %c0_49] : memref<5x64x1xf32, #tpu.memory_space<vmem>>, vector<1x64x1xf32>
    %72 = vector.shape_cast %71 : vector<1x64x1xf32> to vector<64x1xf32>
    %73 = vector.broadcast %72 : vector<64x1xf32> to vector<64x256xf32>
    %74 = arith.addf %70, %73 : vector<64x256xf32>
    %75 = math.tanh %74 : vector<64x256xf32>
    %c4_50 = arith.constant 4 : index
    %c0_51 = arith.constant 0 : index
    %c0_52 = arith.constant 0 : index
    %76 = vector.load %arg4[%c4_50, %c0_51, %c0_52] : memref<5x8x64xf32, #tpu.memory_space<vmem>>, vector<1x8x64xf32>
    %77 = vector.shape_cast %76 : vector<1x8x64xf32> to vector<8x64xf32>
    %cst_53 = arith.constant dense<0.000000e+00> : vector<8x256xf32>
    %78 = tpu.matmul %77, %75, %cst_53 {dimension_numbers = #tpu.dot_dimension_numbers<[1], [0], [0], [1], [0, 0, 1, 1], [], []>} : vector<8x64xf32>, vector<64x256xf32>, vector<8x256xf32> -> vector<8x256xf32>
    %c4_54 = arith.constant 4 : index
    %79 = memref.load %arg1[%c4_54] : memref<5xf32, #tpu.memory_space<smem>>
    %80 = vector.broadcast %79 : f32 to vector<8x256xf32>
    %81 = arith.mulf %80, %69 : vector<8x256xf32>
    %82 = arith.addf %81, %78 : vector<8x256xf32>
    %c4_55 = arith.constant 4 : index
    %c0_56 = arith.constant 0 : index
    %c0_57 = arith.constant 0 : index
    %83 = vector.load %arg5[%c4_55, %c0_56, %c0_57] : memref<5x8x1xf32, #tpu.memory_space<vmem>>, vector<1x8x1xf32>
    %84 = vector.shape_cast %83 : vector<1x8x1xf32> to vector<8x1xf32>
    %85 = vector.broadcast %84 : vector<8x1xf32> to vector<8x256xf32>
    %86 = arith.addf %82, %85 : vector<8x256xf32>
    %c0_58 = arith.constant 0 : index
    %c0_59 = arith.constant 0 : index
    %87 = vector.load %arg7[%c0_58, %c0_59] : memref<8x256xf32, #tpu.memory_space<vmem>>, vector<8x256xf32>
    tpu.vector_store %arg7[%c0_58, %c0_59], %86 {strides = array<i32>} : memref<8x256xf32, #tpu.memory_space<vmem>>, vector<8x256xf32>,
    return
  }
  func.func @transform_0(%arg0: i32) -> i32 {
    %c0_i32 = arith.constant 0 : i32
    %c0_i32_0 = arith.constant 0 : i32
    return %c0_i32 : i32
  }
  func.func @transform_1(%arg0: i32) -> (i32, i32) {
    %c0_i32 = arith.constant 0 : i32
    %c0_i32_0 = arith.constant 0 : i32
    return %c0_i32, %arg0 : i32, i32
  }
  func.func @transform_2(%arg0: i32) -> (i32, i32) {
    %c0_i32 = arith.constant 0 : i32
    %c0_i32_0 = arith.constant 0 : i32
    %c0_i32_1 = arith.constant 0 : i32
    return %c0_i32, %c0_i32_0 : i32, i32
  }
  func.func @transform_3(%arg0: i32) -> (i32, i32, i32) {
    %c0_i32 = arith.constant 0 : i32
    %c0_i32_0 = arith.constant 0 : i32
    %c0_i32_1 = arith.constant 0 : i32
    %c0_i32_2 = arith.constant 0 : i32
    return %c0_i32, %c0_i32_0, %c0_i32_1 : i32, i32, i32
  }
  func.func @transform_4(%arg0: i32) -> (i32, i32, i32) {
    %c0_i32 = arith.constant 0 : i32
    %c0_i32_0 = arith.constant 0 : i32
    %c0_i32_1 = arith.constant 0 : i32
    %c0_i32_2 = arith.constant 0 : i32
    return %c0_i32, %c0_i32_0, %c0_i32_1 : i32, i32, i32
  }
  func.func @transform_5(%arg0: i32) -> (i32, i32, i32) {
    %c0_i32 = arith.constant 0 : i32
    %c0_i32_0 = arith.constant 0 : i32
    %c0_i32_1 = arith.constant 0 : i32
    %c0_i32_2 = arith.constant 0 : i32
    return %c0_i32, %c0_i32_0, %c0_i32_1 : i32, i32, i32
  }
  func.func @transform_6(%arg0: i32) -> (i32, i32) {
    %c0_i32 = arith.constant 0 : i32
    %c0_i32_0 = arith.constant 0 : i32
    return %c0_i32, %arg0 : i32, i32
  }
}

</mosaic_0001>

<llo_original>
// kernel: tile.11
$region0: #{tile.11}
  #allocation0 [shape = 's32[1]{0}', space=sflag, size = 0x4, scoped, tag = 'scoped memory for tile.11']
  %s0 = inlined_call_operand.vmem [shape: f32[4], index: 0, kind: input, shape index: {}]
  %s1 = inlined_call_operand.vmem [shape: f32[2,4], index: 1, kind: output, shape index: {}]
  // Predicated region
  $region2: #{tile.11} parent=0 // pred_check
    _
  $region3: #{tile.11} parent=0 // pred_check_branch
    %3 = sbr.rel (0) target = $region5
  $region4: #{tile.11} parent=0 // pred_region
    _
  $region5: #{tile.11} parent=0 // pred_fallthru
    _
  %v4 = vld [vmem:[%s0] ss:$0 sm:$0xff]
  %5 = vst [vmem:[%s1] sm:$0x3] %v4

// kernel: _forward_impl.1
$region0: #{_forward_impl.1}
  #allocation0 [shape = 'u32[]', space=smem, size = 0x4, offset = 0x4, fixed_abs, tag = 'smem constant byte address 0x4 - core index']
  #allocation1 [shape = 'u32[144,128]{1,0:T(1,128)}', space=vmem, size = 0x12000, scoped, tag = 'internal scratch']
  %s0 = inlined_call_operand.hbm [shape: f32[5], index: 0, kind: input, shape index: {}]
  %s1 = inlined_call_operand.hbm [shape: f32[8,256], index: 1, kind: input, shape index: {}, may-alias: {1,6}]
  %s2 = inlined_call_operand.hbm [shape: f32[64,8], index: 2, kind: input, shape index: {}]
  %s3 = inlined_call_operand.hbm [shape: f32[5,8,64], index: 3, kind: input, shape index: {}]
  %s4 = inlined_call_operand.hbm [shape: f32[5,8,1], index: 4, kind: input, shape index: {}]
  %s5 = inlined_call_operand.hbm [shape: f32[5,64,1], index: 5, kind: input, shape index: {}]
  %s6 = inlined_call_operand.hbm [shape: f32[8,256], index: 6, kind: output, shape index: {}, may-alias: {1,6}]
  %s7 = sld [smem:[#allocation0]]
  $region58: #{_forward_impl.1} parent=0
    _
  %s9 = ssub.s32 1, %s7
  %s10 = scalar_select 0, %s9, %s7
  $region1: #{_forward_impl.1} parent=0
    #allocation2 [shape = 'u8[512]{0}', space=smem, size = 0x200, scoped, tag = 'input window, operand 0, single buffered']
    #allocation3 [shape = 's32[1]{0}', space=sflag, size = 0x4, scoped, tag = 'scoped memory for _forward_impl.1']
    #allocation4 [shape = 's32[1]{0}', space=sflag, size = 0x4, scoped, tag = 'scoped memory for _forward_impl.1']
    #allocation5 [shape = 's32[1]{0}', space=sflag, size = 0x4, scoped, tag = 'scoped memory for _forward_impl.1']
    #allocation6 [shape = 'u8[8192]{0}', space=vmem, size = 0x2000, scoped, tag = 'input window, operand 1, single buffered']
    #allocation7 [shape = 'u8[32768]{0}', space=vmem, size = 0x8000, scoped, tag = 'input window, operand 2, single buffered']
    #allocation8 [shape = 's32[1]{0}', space=sflag, size = 0x4, scoped, tag = 'scoped memory for _forward_impl.1']
    #allocation9 [shape = 'u8[20480]{0}', space=vmem, size = 0x5000, scoped, tag = 'input window, operand 3, single buffered']
    #allocation10 [shape = 'u8[20480]{0}', space=vmem, size = 0x5000, scoped, tag = 'input window, operand 4, single buffered']
    #allocation11 [shape = 's32[1]{0}', space=sflag, size = 0x4, scoped, tag = 'scoped memory for _forward_impl.1']
    #allocation12 [shape = 'u8[163840]{0}', space=vmem, size = 0x28000, scoped, tag = 'input window, operand 5, single buffered']
    #allocation13 [shape = 'u8[8192]{0}', space=vmem, size = 0x2000, scoped, tag = 'output window, operand 0, single buffered']
    %11 = vsyncpa [#allocation5], 0
    %12 = vsyncpa [#allocation3], 0
    %13 = vsyncpa [#allocation8], 0
    %14 = vsyncpa [#allocation11], 0
    %15 = vsyncpa [#allocation4], 0
    // Predicated region
    $region2: #{_forward_impl.1} parent=1 // pred_check
      _
    $region3: #{_forward_impl.1} parent=1 // pred_check_branch
      %17 = sbr.rel (0) target = $region5
    $region4: #{_forward_impl.1} parent=1 // pred_region
      %s19 = ssub.s32 16, 16
      %20 = vsyncadd [#allocation5], %s19
      %23 = dma.hbm_to_smem %s0, 16, [#allocation2], [#allocation5]
    $region5: #{_forward_impl.1} parent=1 // pred_fallthru
      _
    // Predicated region
    $region6: #{_forward_impl.1} parent=1 // pred_check
      _
    $region7: #{_forward_impl.1} parent=1 // pred_check_branch
      %25 = sbr.rel (0) target = $region9
    $region8: #{_forward_impl.1} parent=1 // pred_region
      %s27 = ssub.s32 256, 256
      %28 = vsyncadd [#allocation3], %s27
      %s30 = sshll.u32 [#allocation6], 4
      %s31 = int_to_ptr.vmem [resolvable:$true] %s30
      %33 = dma.hbm_to_vmem [thread:$0]  %s1, 256, %s31, [#allocation3]
    $region9: #{_forward_impl.1} parent=1 // pred_fallthru
      _
    // Predicated region
    $region10: #{_forward_impl.1} parent=1 // pred_check
      _
    $region11: #{_forward_impl.1} parent=1 // pred_check_branch
      %35 = sbr.rel (0) target = $region13
    $region12: #{_forward_impl.1} parent=1 // pred_region
      %s37 = ssub.s32 1024, 1024
      %38 = vsyncadd [#allocation8], %s37
      %s39 = sshll.u32 [#allocation7], 4
      %s40 = int_to_ptr.vmem [resolvable:$true] %s39
      %45 = dma.hbm_to_vmem [thread:$0]  %s2, 1024, %s40, [#allocation8], 128, 128, 8
    $region13: #{_forward_impl.1} parent=1 // pred_fallthru
      _
    // Predicated region
    $region14: #{_forward_impl.1} parent=1 // pred_check
      _
    $region15: #{_forward_impl.1} parent=1 // pred_check_branch
      %47 = sbr.rel (0) target = $region17
    $region16: #{_forward_impl.1} parent=1 // pred_region
      %s49 = ssub.s32 640, 640
      %50 = vsyncadd [#allocation8], %s49
      %s51 = sshll.u32 [#allocation9], 4
      %s52 = int_to_ptr.vmem [resolvable:$true] %s51
      %57 = dma.hbm_to_vmem [thread:$0]  %s3, 640, %s52, [#allocation8], 128, 128, 8
    $region17: #{_forward_impl.1} parent=1 // pred_fallthru
      _
    // Predicated region
    $region18: #{_forward_impl.1} parent=1 // pred_check
      _
    $region19: #{_forward_impl.1} parent=1 // pred_check_branch
      %59 = sbr.rel (0) target = $region21
    $region20: #{_forward_impl.1} parent=1 // pred_region
      %s61 = ssub.s32 640, 640
      %62 = vsyncadd [#allocation11], %s61
      %s63 = sshll.u32 [#allocation10], 4
      %s64 = int_to_ptr.vmem [resolvable:$true] %s63
      %69 = dma.hbm_to_vmem [thread:$0]  %s4, 640, %s64, [#allocation11], 128, 128, 8
    $region21: #{_forward_impl.1} parent=1 // pred_fallthru
      _
    // Predicated region
    $region22: #{_forward_impl.1} parent=1 // pred_check
      _
    $region23: #{_forward_impl.1} parent=1 // pred_check_branch
      %71 = sbr.rel (0) target = $region25
    $region24: #{_forward_impl.1} parent=1 // pred_region
      %s73 = ssub.s32 5120, 5120
      %74 = vsyncadd [#allocation11], %s73
      %s75 = sshll.u32 [#allocation12], 4
      %s76 = int_to_ptr.vmem [resolvable:$true] %s75
      %81 = dma.hbm_to_vmem [thread:$0]  %s5, 5120, %s76, [#allocation11], 128, 128, 8
    $region25: #{_forward_impl.1} parent=1 // pred_fallthru
      _
    // Predicated region
    $region26: #{_forward_impl.1} parent=1 // pred_check
      _
    $region27: #{_forward_impl.1} parent=1 // pred_check_branch
      %83 = sbr.rel (0) target = $region29
    $region28: #{_forward_impl.1} parent=1 // pred_region
      %84 = dma.done [#allocation5], 16
    $region29: #{_forward_impl.1} parent=1 // pred_fallthru
      _
    // Predicated region
    $region30: #{_forward_impl.1} parent=1 // pred_check
      _
    $region31: #{_forward_impl.1} parent=1 // pred_check_branch
      %86 = sbr.rel (0) target = $region33
    $region32: #{_forward_impl.1} parent=1 // pred_region
      %87 = dma.done [#allocation3], 256
    $region33: #{_forward_impl.1} parent=1 // pred_fallthru
      _
    // Predicated region
    $region34: #{_forward_impl.1} parent=1 // pred_check
      _
    $region35: #{_forward_impl.1} parent=1 // pred_check_branch
      %89 = sbr.rel (0) target = $region37
    $region36: #{_forward_impl.1} parent=1 // pred_region
      %90 = dma.done [#allocation8], 1024
    $region37: #{_forward_impl.1} parent=1 // pred_fallthru
      _
    // Predicated region
    $region38: #{_forward_impl.1} parent=1 // pred_check
      _
    $region39: #{_forward_impl.1} parent=1 // pred_check_branch
      %92 = sbr.rel (0) target = $region41
    $region40: #{_forward_impl.1} parent=1 // pred_region
      %93 = dma.done [#allocation8], 640
    $region41: #{_forward_impl.1} parent=1 // pred_fallthru
      _
    // Predicated region
    $region42: #{_forward_impl.1} parent=1 // pred_check
      _
    $region43: #{_forward_impl.1} parent=1 // pred_check_branch
      %95 = sbr.rel (0) target = $region45
    $region44: #{_forward_impl.1} parent=1 // pred_region
      %96 = dma.done [#allocation11], 640
    $region45: #{_forward_impl.1} parent=1 // pred_fallthru
      _
    // Predicated region
    $region46: #{_forward_impl.1} parent=1 // pred_check
      _
    $region47: #{_forward_impl.1} parent=1 // pred_check_branch
      %98 = sbr.rel (0) target = $region49
    $region48: #{_forward_impl.1} parent=1 // pred_region
      %99 = dma.done [#allocation11], 5120
    $region49: #{_forward_impl.1} parent=1 // pred_fallthru
      _
    %100 = sfence
    %v101 = vld [vmem:[#allocation6] sm:$0xff]
    %v102 = vld [vmem:[#allocation6 + $0x8] sm:$0xff]
    %v103 = vld [vmem:[#allocation7] sm:$0xff]
    %v104 = vld [vmem:[#allocation7 + $0x8] sm:$0xff]
    %v105 = vld [vmem:[#allocation7 + $0x10] sm:$0xff]
    %v106 = vld [vmem:[#allocation7 + $0x18] sm:$0xff]
    %v107 = vld [vmem:[#allocation7 + $0x20] sm:$0xff]
    %v108 = vld [vmem:[#allocation7 + $0x28] sm:$0xff]
    %v109 = vld [vmem:[#allocation7 + $0x30] sm:$0xff]
    %v110 = vld [vmem:[#allocation7 + $0x38] sm:$0xff]
    %v111 = vld [vmem:[#allocation12] sm:$0xff]
    %v112 = vld [vmem:[#allocation12 + $0x8] sm:$0xff]
    %v113 = vld [vmem:[#allocation12 + $0x10] sm:$0xff]
    %v114 = vld [vmem:[#allocation12 + $0x18] sm:$0xff]
    %v115 = vld [vmem:[#allocation12 + $0x20] sm:$0xff]
    %v116 = vld [vmem:[#allocation12 + $0x28] sm:$0xff]
    %v117 = vld [vmem:[#allocation12 + $0x30] sm:$0xff]
    %v118 = vld [vmem:[#allocation12 + $0x38] sm:$0xff]
    %120 = vset.pattern.permute.xlu0 0
    %121 = vperm.xlu0 %120, %v111
    %v122 = vpop.permute.xlu0 %121
    %125 = vset.pattern.permute.xlu0 0
    %126 = vperm.xlu0 %125, %v112
    %v127 = vpop.permute.xlu0 %126
    %130 = vset.pattern.permute.xlu0 0
    %131 = vperm.xlu0 %130, %v113
    %v132 = vpop.permute.xlu0 %131
    %135 = vset.pattern.permute.xlu0 0
    %136 = vperm.xlu0 %135, %v114
    %v137 = vpop.permute.xlu0 %136
    %140 = vset.pattern.permute.xlu0 0
    %141 = vperm.xlu0 %140, %v115
    %v142 = vpop.permute.xlu0 %141
    %145 = vset.pattern.permute.xlu0 0
    %146 = vperm.xlu0 %145, %v116
    %v147 = vpop.permute.xlu0 %146
    %150 = vset.pattern.permute.xlu0 0
    %151 = vperm.xlu0 %150, %v117
    %v152 = vpop.permute.xlu0 %151
    %155 = vset.pattern.permute.xlu0 0
    %156 = vperm.xlu0 %155, %v118
    %v157 = vpop.permute.xlu0 %156
    %vm159 = vcmask 64512
    %v161 = vsel %vm159, %v103, 0
    %v164 = vsel %vm159, %v104, 0
    %v167 = vsel %vm159, %v105, 0
    %v170 = vsel %vm159, %v106, 0
    %v173 = vsel %vm159, %v107, 0
    %v176 = vsel %vm159, %v108, 0
    %v179 = vsel %vm159, %v109, 0
    %v182 = vsel %vm159, %v110, 0
    %184 = vmatprep.subr.mxu0 %v102
    %185 = vmatpush1.msra.mxu0 %v101
    %186 = vmatprep.subr.mxu0 0.0
    %187 = vmatpush1.msra.mxu0 0.0
    %188 = vmatprep.subr.mxu0 0.0
    %189 = vmatpush1.msra.mxu0 0.0
    %190 = vmatprep.subr.mxu0 0.0
    %191 = vmatpush1.msra.mxu0 0.0
    %192 = vmatprep.subr.mxu0 0.0
    %193 = vmatpush1.msra.mxu0 0.0
    %194 = vmatprep.subr.mxu0 0.0
    %195 = vmatpush1.msra.mxu0 0.0
    %196 = vmatprep.subr.mxu0 0.0
    %197 = vmatpush1.msra.mxu0 0.0
    %198 = vmatprep.subr.mxu0 0.0
    %199 = vmatpush1.msra.mxu0 0.0
    %200 = vmatprep.subr.mxu0 0.0
    %201 = vmatpush1.msra.mxu0 0.0
    %202 = vmatprep.subr.mxu0 0.0
    %203 = vmatpush1.msra.mxu0 0.0
    %204 = vmatprep.subr.mxu0 0.0
    %205 = vmatpush1.msra.mxu0 0.0
    %206 = vmatprep.subr.mxu0 0.0
    %207 = vmatpush1.msra.mxu0 0.0
    %208 = vmatprep.subr.mxu0 0.0
    %209 = vmatpush1.msra.mxu0 0.0
    %210 = vmatprep.subr.mxu0 0.0
    %211 = vmatpush1.msra.mxu0 0.0
    %212 = vmatprep.subr.mxu0 0.0
    %213 = vmatpush1.msra.mxu0 0.0
    %214 = vmatprep.subr.mxu0 0.0
    %215 = vmatpush1.msra.mxu0 0.0
    %216 = vmatprep.subr.mxu0 0.0
    %217 = vmatpush1.msra.mxu0 0.0
    %218 = vmatprep.subr.mxu0 0.0
    %219 = vmatpush1.msra.mxu0 0.0
    %220 = vmatprep.subr.mxu0 0.0
    %221 = vmatpush1.msra.mxu0 0.0
    %222 = vmatprep.subr.mxu0 0.0
    %223 = vmatpush1.msra.mxu0 0.0
    %224 = vmatprep.subr.mxu0 0.0
    %225 = vmatpush1.msra.mxu0 0.0
    %226 = vmatprep.subr.mxu0 0.0
    %227 = vmatpush1.msra.mxu0 0.0
    %228 = vmatprep.subr.mxu0 0.0
    %229 = vmatpush1.msra.mxu0 0.0
    %230 = vmatprep.subr.mxu0 0.0
    %231 = vmatpush1.msra.mxu0 0.0
    %232 = vmatprep.subr.mxu0 0.0
    %233 = vmatpush1.msra.mxu0 0.0
    %234 = vmatprep.subr.mxu0 0.0
    %235 = vmatpush1.msra.mxu0 0.0
    %236 = vmatprep.subr.mxu0 0.0
    %237 = vmatpush1.msra.mxu0 0.0
    %238 = vmatprep.subr.mxu0 0.0
    %239 = vmatpush1.msra.mxu0 0.0
    %240 = vmatprep.subr.mxu0 0.0
    %241 = vmatpush1.msra.mxu0 0.0
    %242 = vmatprep.subr.mxu0 0.0
    %243 = vmatpush1.msra.mxu0 0.0
    %244 = vmatprep.subr.mxu0 0.0
    %245 = vmatpush1.msra.mxu0 0.0
    %246 = vmatprep.subr.mxu0 0.0
    %247 = vmatpush1.msra.mxu0 0.0
    %248 = vmatprep.mubr.f32.mxu0 0.0
    %249 = vmatmul.mubr.f32.gmra.mrb[0].mxu0 %v161
    %v250 = vpop.f32.mrb[0].mxu0
    %v251 = vadd.f32 %v122, %v250
    %v252 = vpop.f32.mrb[0].mxu0
    %v253 = vadd.f32 %v122, %v252
    %254 = vmatprep.mubr.f32.mxu0 0.0
    %255 = vmatmul.mubr.f32.gmra.mrb[0].mxu0 %v164
    %v256 = vpop.f32.mrb[0].mxu0
    %v257 = vadd.f32 %v127, %v256
    %v258 = vpop.f32.mrb[0].mxu0
    %v259 = vadd.f32 %v127, %v258
    %260 = vmatprep.mubr.f32.mxu0 0.0
    %261 = vmatmul.mubr.f32.gmra.mrb[0].mxu0 %v167
    %v262 = vpop.f32.mrb[0].mxu0
    %v263 = vadd.f32 %v132, %v262
    %v264 = vpop.f32.mrb[0].mxu0
    %v265 = vadd.f32 %v132, %v264
    %266 = vmatprep.mubr.f32.mxu0 0.0
    %267 = vmatmul.mubr.f32.gmra.mrb[0].mxu0 %v170
    %v268 = vpop.f32.mrb[0].mxu0
    %v269 = vadd.f32 %v137, %v268
    %v270 = vpop.f32.mrb[0].mxu0
    %v271 = vadd.f32 %v137, %v270
    %272 = vmatprep.mubr.f32.mxu0 0.0
    %273 = vmatmul.mubr.f32.gmra.mrb[0].mxu0 %v173
    %v274 = vpop.f32.mrb[0].mxu0
    %v275 = vadd.f32 %v142, %v274
    %v276 = vpop.f32.mrb[0].mxu0
    %v277 = vadd.f32 %v142, %v276
    %278 = vmatprep.mubr.f32.mxu0 0.0
    %279 = vmatmul.mubr.f32.gmra.mrb[0].mxu0 %v176
    %v280 = vpop.f32.mrb[0].mxu0
    %v281 = vadd.f32 %v147, %v280
    %v282 = vpop.f32.mrb[0].mxu0
    %v283 = vadd.f32 %v147, %v282
    %284 = vmatprep.mubr.f32.mxu0 0.0
    %285 = vmatmul.mubr.f32.gmra.mrb[0].mxu0 %v179
    %v286 = vpop.f32.mrb[0].mxu0
    %v287 = vadd.f32 %v152, %v286
    %v288 = vpop.f32.mrb[0].mxu0
    %v289 = vadd.f32 %v152, %v288
    %290 = vmatprep.mubr.f32.mxu0 0.0
    %291 = vmatmul.mubr.f32.gmra.mrb[0].mxu0 %v182
    %v292 = vpop.f32.mrb[0].mxu0
    %v293 = vadd.f32 %v157, %v292
    %v294 = vpop.f32.mrb[0].mxu0
    %v295 = vadd.f32 %v157, %v294
    %296 = vdwg.mxu0
    %v297 = vtanh.pop %v251
    %v298 = vtanh.pop %v253
    %v299 = vtanh.pop %v257
    %v300 = vtanh.pop %v259
    %v301 = vtanh.pop %v263
    %v302 = vtanh.pop %v265
    %v303 = vtanh.pop %v269
    %v304 = vtanh.pop %v271
    %v305 = vtanh.pop %v275
    %v306 = vtanh.pop %v277
    %v307 = vtanh.pop %v281
    %v308 = vtanh.pop %v283
    %v309 = vtanh.pop %v287
    %v310 = vtanh.pop %v289
    %v311 = vtanh.pop %v293
    %v312 = vtanh.pop %v295
    %v313 = vld [vmem:[#allocation9] sm:$0xff]
    %vm314 = vcmask 523264
    %v316 = vsel %vm314, %v313, 0
    %318 = vmatprep.subr.mxu0 %v298
    %319 = vmatpush1.msra.mxu0 %v297
    %320 = vmatprep.subr.mxu0 %v300
    %321 = vmatpush1.msra.mxu0 %v299
    %322 = vmatprep.subr.mxu0 %v302
    %323 = vmatpush1.msra.mxu0 %v301
    %324 = vmatprep.subr.mxu0 %v304
    %325 = vmatpush1.msra.mxu0 %v303
    %326 = vmatprep.subr.mxu0 %v306
    %327 = vmatpush1.msra.mxu0 %v305
    %328 = vmatprep.subr.mxu0 %v308
    %329 = vmatpush1.msra.mxu0 %v307
    %330 = vmatprep.subr.mxu0 %v310
    %331 = vmatpush1.msra.mxu0 %v309
    %332 = vmatprep.subr.mxu0 %v312
    %333 = vmatpush1.msra.mxu0 %v311
    %334 = vmatprep.subr.mxu0 0.0
    %335 = vmatpush1.msra.mxu0 0.0
    %336 = vmatprep.subr.mxu0 0.0
    %337 = vmatpush1.msra.mxu0 0.0
    %338 = vmatprep.subr.mxu0 0.0
    %339 = vmatpush1.msra.mxu0 0.0
    %340 = vmatprep.subr.mxu0 0.0
    %341 = vmatpush1.msra.mxu0 0.0
    %342 = vmatprep.subr.mxu0 0.0
    %343 = vmatpush1.msra.mxu0 0.0
    %344 = vmatprep.subr.mxu0 0.0
    %345 = vmatpush1.msra.mxu0 0.0
    %346 = vmatprep.subr.mxu0 0.0
    %347 = vmatpush1.msra.mxu0 0.0
    %348 = vmatprep.subr.mxu0 0.0
    %349 = vmatpush1.msra.mxu0 0.0
    %350 = vmatprep.subr.mxu0 0.0
    %351 = vmatpush1.msra.mxu0 0.0
    %352 = vmatprep.subr.mxu0 0.0
    %353 = vmatpush1.msra.mxu0 0.0
    %354 = vmatprep.subr.mxu0 0.0
    %355 = vmatpush1.msra.mxu0 0.0
    %356 = vmatprep.subr.mxu0 0.0
    %357 = vmatpush1.msra.mxu0 0.0
    %358 = vmatprep.subr.mxu0 0.0
    %359 = vmatpush1.msra.mxu0 0.0
    %360 = vmatprep.subr.mxu0 0.0
    %361 = vmatpush1.msra.mxu0 0.0
    %362 = vmatprep.subr.mxu0 0.0
    %363 = vmatpush1.msra.mxu0 0.0
    %364 = vmatprep.subr.mxu0 0.0
    %365 = vmatpush1.msra.mxu0 0.0
    %366 = vmatprep.subr.mxu0 0.0
    %367 = vmatpush1.msra.mxu0 0.0
    %368 = vmatprep.subr.mxu0 0.0
    %369 = vmatpush1.msra.mxu0 0.0
    %370 = vmatprep.subr.mxu0 0.0
    %371 = vmatpush1.msra.mxu0 0.0
    %372 = vmatprep.subr.mxu0 0.0
    %373 = vmatpush1.msra.mxu0 0.0
    %374 = vmatprep.subr.mxu0 0.0
    %375 = vmatpush1.msra.mxu0 0.0
    %376 = vmatprep.subr.mxu0 0.0
    %377 = vmatpush1.msra.mxu0 0.0
    %378 = vmatprep.subr.mxu0 0.0
    %379 = vmatpush1.msra.mxu0 0.0
    %380 = vmatprep.subr.mxu0 0.0
    %381 = vmatpush1.msra.mxu0 0.0
    %382 = vmatprep.mubr.f32.mxu0 0.0
    %383 = vmatmul.mubr.f32.gmra.mrb[0].mxu0 %v316
    %v384 = vpop.f32.mrb[0].mxu0
    %v385 = vadd.f32 0.0, %v384
    %v386 = vpop.f32.mrb[0].mxu0
    %v387 = vadd.f32 0.0, %v386
    %388 = vdwg.mxu0
    %s389 = sld [smem:[#allocation2]]
    %v390 = vstv %s389
    %v391 = vmul.f32 %v390, %v101
    %v392 = vmul.f32 %v390, %v102
    %v393 = vadd.f32 %v391, %v385
    %v394 = vadd.f32 %v392, %v387
    %v395 = vld [vmem:[#allocation10] sm:$0xff]
    %397 = vset.pattern.permute.xlu0 0
    %398 = vperm.xlu0 %397, %v395
    %v399 = vpop.permute.xlu0 %398
    %v401 = vadd.f32 %v393, %v399
    %v402 = vadd.f32 %v394, %v399
    %s403 = scalar_lea.vmem [#allocation12], 64
    %v404 = vld [vmem:[%s403] sm:$0xff]
    %v405 = vld [vmem:[%s403 + $0x8] sm:$0xff]
    %v406 = vld [vmem:[%s403 + $0x10] sm:$0xff]
    %v407 = vld [vmem:[%s403 + $0x18] sm:$0xff]
    %v408 = vld [vmem:[%s403 + $0x20] sm:$0xff]
    %v409 = vld [vmem:[%s403 + $0x28] sm:$0xff]
    %v410 = vld [vmem:[%s403 + $0x30] sm:$0xff]
    %v411 = vld [vmem:[%s403 + $0x38] sm:$0xff]
    %413 = vset.pattern.permute.xlu0 0
    %414 = vperm.xlu0 %413, %v404
    %v415 = vpop.permute.xlu0 %414
    %418 = vset.pattern.permute.xlu0 0
    %419 = vperm.xlu0 %418, %v405
    %v420 = vpop.permute.xlu0 %419
    %423 = vset.pattern.permute.xlu0 0
    %424 = vperm.xlu0 %423, %v406
    %v425 = vpop.permute.xlu0 %424
    %428 = vset.pattern.permute.xlu0 0
    %429 = vperm.xlu0 %428, %v407
    %v430 = vpop.permute.xlu0 %429
    %433 = vset.pattern.permute.xlu0 0
    %434 = vperm.xlu0 %433, %v408
    %v435 = vpop.permute.xlu0 %434
    %438 = vset.pattern.permute.xlu0 0
    %439 = vperm.xlu0 %438, %v409
    %v440 = vpop.permute.xlu0 %439
    %443 = vset.pattern.permute.xlu0 0
    %444 = vperm.xlu0 %443, %v410
    %v445 = vpop.permute.xlu0 %444
    %448 = vset.pattern.permute.xlu0 0
    %449 = vperm.xlu0 %448, %v411
    %v450 = vpop.permute.xlu0 %449
    %452 = vmatprep.subr.mxu0 %v402
    %453 = vmatpush1.msra.mxu0 %v401
    %454 = vmatprep.subr.mxu0 0.0
    %455 = vmatpush1.msra.mxu0 0.0
    %456 = vmatprep.subr.mxu0 0.0
    %457 = vmatpush1.msra.mxu0 0.0
    %458 = vmatprep.subr.mxu0 0.0
    %459 = vmatpush1.msra.mxu0 0.0
    %460 = vmatprep.subr.mxu0 0.0
    %461 = vmatpush1.msra.mxu0 0.0
    %462 = vmatprep.subr.mxu0 0.0
    %463 = vmatpush1.msra.mxu0 0.0
    %464 = vmatprep.subr.mxu0 0.0
    %465 = vmatpush1.msra.mxu0 0.0
    %466 = vmatprep.subr.mxu0 0.0
    %467 = vmatpush1.msra.mxu0 0.0
    %468 = vmatprep.subr.mxu0 0.0
    %469 = vmatpush1.msra.mxu0 0.0
    %470 = vmatprep.subr.mxu0 0.0
    %471 = vmatpush1.msra.mxu0 0.0
    %472 = vmatprep.subr.mxu0 0.0
    %473 = vmatpush1.msra.mxu0 0.0
    %474 = vmatprep.subr.mxu0 0.0
    %475 = vmatpush1.msra.mxu0 0.0
    %476 = vmatprep.subr.mxu0 0.0
    %477 = vmatpush1.msra.mxu0 0.0
    %478 = vmatprep.subr.mxu0 0.0
    %479 = vmatpush1.msra.mxu0 0.0
    %480 = vmatprep.subr.mxu0 0.0
    %481 = vmatpush1.msra.mxu0 0.0
    %482 = vmatprep.subr.mxu0 0.0
    %483 = vmatpush1.msra.mxu0 0.0
    %484 = vmatprep.subr.mxu0 0.0
    %485 = vmatpush1.msra.mxu0 0.0
    %486 = vmatprep.subr.mxu0 0.0
    %487 = vmatpush1.msra.mxu0 0.0
    %488 = vmatprep.subr.mxu0 0.0
    %489 = vmatpush1.msra.mxu0 0.0
    %490 = vmatprep.subr.mxu0 0.0
    %491 = vmatpush1.msra.mxu0 0.0
    %492 = vmatprep.subr.mxu0 0.0
    %493 = vmatpush1.msra.mxu0 0.0
    %494 = vmatprep.subr.mxu0 0.0
    %495 = vmatpush1.msra.mxu0 0.0
    %496 = vmatprep.subr.mxu0 0.0
    %497 = vmatpush1.msra.mxu0 0.0
    %498 = vmatprep.subr.mxu0 0.0
    %499 = vmatpush1.msra.mxu0 0.0
    %500 = vmatprep.subr.mxu0 0.0
    %501 = vmatpush1.msra.mxu0 0.0
    %502 = vmatprep.subr.mxu0 0.0
    %503 = vmatpush1.msra.mxu0 0.0
    %504 = vmatprep.subr.mxu0 0.0
    %505 = vmatpush1.msra.mxu0 0.0
    %506 = vmatprep.subr.mxu0 0.0
    %507 = vmatpush1.msra.mxu0 0.0
    %508 = vmatprep.subr.mxu0 0.0
    %509 = vmatpush1.msra.mxu0 0.0
    %510 = vmatprep.subr.mxu0 0.0
    %511 = vmatpush1.msra.mxu0 0.0
    %512 = vmatprep.subr.mxu0 0.0
    %513 = vmatpush1.msra.mxu0 0.0
    %514 = vmatprep.subr.mxu0 0.0
    %515 = vmatpush1.msra.mxu0 0.0
    %516 = vmatprep.mubr.f32.mxu0 0.0
    %517 = vmatmul.mubr.f32.gmra.mrb[0].mxu0 %v161
    %v518 = vpop.f32.mrb[0].mxu0
    %v519 = vadd.f32 %v415, %v518
    %v520 = vpop.f32.mrb[0].mxu0
    %v521 = vadd.f32 %v415, %v520
    %522 = vmatprep.mubr.f32.mxu0 0.0
    %523 = vmatmul.mubr.f32.gmra.mrb[0].mxu0 %v164
    %v524 = vpop.f32.mrb[0].mxu0
    %v525 = vadd.f32 %v420, %v524
    %v526 = vpop.f32.mrb[0].mxu0
    %v527 = vadd.f32 %v420, %v526
    %528 = vmatprep.mubr.f32.mxu0 0.0
    %529 = vmatmul.mubr.f32.gmra.mrb[0].mxu0 %v167
    %v530 = vpop.f32.mrb[0].mxu0
    %v531 = vadd.f32 %v425, %v530
    %v532 = vpop.f32.mrb[0].mxu0
    %v533 = vadd.f32 %v425, %v532
    %534 = vmatprep.mubr.f32.mxu0 0.0
    %535 = vmatmul.mubr.f32.gmra.mrb[0].mxu0 %v170
    %v536 = vpop.f32.mrb[0].mxu0
    %v537 = vadd.f32 %v430, %v536
    %v538 = vpop.f32.mrb[0].mxu0
    %v539 = vadd.f32 %v430, %v538
    %540 = vmatprep.mubr.f32.mxu0 0.0
    %541 = vmatmul.mubr.f32.gmra.mrb[0].mxu0 %v173
    %v542 = vpop.f32.mrb[0].mxu0
    %v543 = vadd.f32 %v435, %v542
    %v544 = vpop.f32.mrb[0].mxu0
    %v545 = vadd.f32 %v435, %v544
    %546 = vmatprep.mubr.f32.mxu0 0.0
    %547 = vmatmul.mubr.f32.gmra.mrb[0].mxu0 %v176
    %v548 = vpop.f32.mrb[0].mxu0
    %v549 = vadd.f32 %v440, %v548
    %v550 = vpop.f32.mrb[0].mxu0
    %v551 = vadd.f32 %v440, %v550
    %552 = vmatprep.mubr.f32.mxu0 0.0
    %553 = vmatmul.mubr.f32.gmra.mrb[0].mxu0 %v179
    %v554 = vpop.f32.mrb[0].mxu0
    %v555 = vadd.f32 %v445, %v554
    %v556 = vpop.f32.mrb[0].mxu0
    %v557 = vadd.f32 %v445, %v556
    %558 = vmatprep.mubr.f32.mxu0 0.0
    %559 = vmatmul.mubr.f32.gmra.mrb[0].mxu0 %v182
    %v560 = vpop.f32.mrb[0].mxu0
    %v561 = vadd.f32 %v450, %v560
    %v562 = vpop.f32.mrb[0].mxu0
    %v563 = vadd.f32 %v450, %v562
    %564 = vdwg.mxu0
    %v565 = vtanh.pop %v519
    %v566 = vtanh.pop %v521
    %v567 = vtanh.pop %v525
    %v568 = vtanh.pop %v527
    %v569 = vtanh.pop %v531
    %v570 = vtanh.pop %v533
    %v571 = vtanh.pop %v537
    %v572 = vtanh.pop %v539
    %v573 = vtanh.pop %v543
    %v574 = vtanh.pop %v545
    %v575 = vtanh.pop %v549
    %v576 = vtanh.pop %v551
    %v577 = vtanh.pop %v555
    %v578 = vtanh.pop %v557
    %v579 = vtanh.pop %v561
    %v580 = vtanh.pop %v563
    %s581 = scalar_lea.vmem [#allocation9], 8
    %v582 = vld [vmem:[%s581] sm:$0xff]
    %v584 = vsel %vm314, %v582, 0
    %586 = vmatprep.subr.mxu0 %v566
    %587 = vmatpush1.msra.mxu0 %v565
    %588 = vmatprep.subr.mxu0 %v568
    %589 = vmatpush1.msra.mxu0 %v567
    %590 = vmatprep.subr.mxu0 %v570
    %591 = vmatpush1.msra.mxu0 %v569
    %592 = vmatprep.subr.mxu0 %v572
    %593 = vmatpush1.msra.mxu0 %v571
    %594 = vmatprep.subr.mxu0 %v574
    %595 = vmatpush1.msra.mxu0 %v573
    %596 = vmatprep.subr.mxu0 %v576
    %597 = vmatpush1.msra.mxu0 %v575
    %598 = vmatprep.subr.mxu0 %v578
    %599 = vmatpush1.msra.mxu0 %v577
    %600 = vmatprep.subr.mxu0 %v580
    %601 = vmatpush1.msra.mxu0 %v579
    %602 = vmatprep.subr.mxu0 0.0
    %603 = vmatpush1.msra.mxu0 0.0
    %604 = vmatprep.subr.mxu0 0.0
    %605 = vmatpush1.msra.mxu0 0.0
    %606 = vmatprep.subr.mxu0 0.0
    %607 = vmatpush1.msra.mxu0 0.0
    %608 = vmatprep.subr.mxu0 0.0
    %609 = vmatpush1.msra.mxu0 0.0
    %610 = vmatprep.subr.mxu0 0.0
    %611 = vmatpush1.msra.mxu0 0.0
    %612 = vmatprep.subr.mxu0 0.0
    %613 = vmatpush1.msra.mxu0 0.0
    %614 = vmatprep.subr.mxu0 0.0
    %615 = vmatpush1.msra.mxu0 0.0
    %616 = vmatprep.subr.mxu0 0.0
    %617 = vmatpush1.msra.mxu0 0.0
    %618 = vmatprep.subr.mxu0 0.0
    %619 = vmatpush1.msra.mxu0 0.0
    %620 = vmatprep.subr.mxu0 0.0
    %621 = vmatpush1.msra.mxu0 0.0
    %622 = vmatprep.subr.mxu0 0.0
    %623 = vmatpush1.msra.mxu0 0.0
    %624 = vmatprep.subr.mxu0 0.0
    %625 = vmatpush1.msra.mxu0 0.0
    %626 = vmatprep.subr.mxu0 0.0
    %627 = vmatpush1.msra.mxu0 0.0
    %628 = vmatprep.subr.mxu0 0.0
    %629 = vmatpush1.msra.mxu0 0.0
    %630 = vmatprep.subr.mxu0 0.0
    %631 = vmatpush1.msra.mxu0 0.0
    %632 = vmatprep.subr.mxu0 0.0
    %633 = vmatpush1.msra.mxu0 0.0
    %634 = vmatprep.subr.mxu0 0.0
    %635 = vmatpush1.msra.mxu0 0.0
    %636 = vmatprep.subr.mxu0 0.0
    %637 = vmatpush1.msra.mxu0 0.0
    %638 = vmatprep.subr.mxu0 0.0
    %639 = vmatpush1.msra.mxu0 0.0
    %640 = vmatprep.subr.mxu0 0.0
    %641 = vmatpush1.msra.mxu0 0.0
    %642 = vmatprep.subr.mxu0 0.0
    %643 = vmatpush1.msra.mxu0 0.0
    %644 = vmatprep.subr.mxu0 0.0
    %645 = vmatpush1.msra.mxu0 0.0
    %646 = vmatprep.subr.mxu0 0.0
    %647 = vmatpush1.msra.mxu0 0.0
    %648 = vmatprep.subr.mxu0 0.0
    %649 = vmatpush1.msra.mxu0 0.0
    %650 = vmatprep.mubr.f32.mxu0 0.0
    %651 = vmatmul.mubr.f32.gmra.mrb[0].mxu0 %v584
    %v652 = vpop.f32.mrb[0].mxu0
    %v653 = vadd.f32 0.0, %v652
    %v654 = vpop.f32.mrb[0].mxu0
    %v655 = vadd.f32 0.0, %v654
    %656 = vdwg.mxu0
    %s657 = sld [smem:[#allocation2 + $0x1]]
    %v658 = vstv %s657
    %v659 = vmul.f32 %v658, %v401
    %v660 = vmul.f32 %v658, %v402
    %v661 = vadd.f32 %v659, %v653
    %v662 = vadd.f32 %v660, %v655
    %s663 = scalar_lea.vmem [#allocation10], 8
    %v664 = vld [vmem:[%s663] sm:$0xff]
    %666 = vset.pattern.permute.xlu0 0
    %667 = vperm.xlu0 %666, %v664
    %v668 = vpop.permute.xlu0 %667
    %v670 = vadd.f32 %v661, %v668
    %v671 = vadd.f32 %v662, %v668
    %s672 = scalar_lea.vmem [#allocation12], 128
    %v673 = vld [vmem:[%s672] sm:$0xff]
    %v674 = vld [vmem:[%s672 + $0x8] sm:$0xff]
    %v675 = vld [vmem:[%s672 + $0x10] sm:$0xff]
    %v676 = vld [vmem:[%s672 + $0x18] sm:$0xff]
    %v677 = vld [vmem:[%s672 + $0x20] sm:$0xff]
    %v678 = vld [vmem:[%s672 + $0x28] sm:$0xff]
    %v679 = vld [vmem:[%s672 + $0x30] sm:$0xff]
    %v680 = vld [vmem:[%s672 + $0x38] sm:$0xff]
    %682 = vset.pattern.permute.xlu0 0
    %683 = vperm.xlu0 %682, %v673
    %v684 = vpop.permute.xlu0 %683
    %687 = vset.pattern.permute.xlu0 0
    %688 = vperm.xlu0 %687, %v674
    %v689 = vpop.permute.xlu0 %688
    %692 = vset.pattern.permute.xlu0 0
    %693 = vperm.xlu0 %692, %v675
    %v694 = vpop.permute.xlu0 %693
    %697 = vset.pattern.permute.xlu0 0
    %698 = vperm.xlu0 %697, %v676
    %v699 = vpop.permute.xlu0 %698
    %702 = vset.pattern.permute.xlu0 0
    %703 = vperm.xlu0 %702, %v677
    %v704 = vpop.permute.xlu0 %703
    %707 = vset.pattern.permute.xlu0 0
    %708 = vperm.xlu0 %707, %v678
    %v709 = vpop.permute.xlu0 %708
    %712 = vset.pattern.permute.xlu0 0
    %713 = vperm.xlu0 %712, %v679
    %v714 = vpop.permute.xlu0 %713
    %717 = vset.pattern.permute.xlu0 0
    %718 = vperm.xlu0 %717, %v680
    %v719 = vpop.permute.xlu0 %718
    %721 = vmatprep.subr.mxu0 %v671
    %722 = vmatpush1.msra.mxu0 %v670
    %723 = vmatprep.subr.mxu0 0.0
    %724 = vmatpush1.msra.mxu0 0.0
    %725 = vmatprep.subr.mxu0 0.0
    %726 = vmatpush1.msra.mxu0 0.0
    %727 = vmatprep.subr.mxu0 0.0
    %728 = vmatpush1.msra.mxu0 0.0
    %729 = vmatprep.subr.mxu0 0.0
    %730 = vmatpush1.msra.mxu0 0.0
    %731 = vmatprep.subr.mxu0 0.0
    %732 = vmatpush1.msra.mxu0 0.0
    %733 = vmatprep.subr.mxu0 0.0
    %734 = vmatpush1.msra.mxu0 0.0
    %735 = vmatprep.subr.mxu0 0.0
    %736 = vmatpush1.msra.mxu0 0.0
    %737 = vmatprep.subr.mxu0 0.0
    %738 = vmatpush1.msra.mxu0 0.0
    %739 = vmatprep.subr.mxu0 0.0
    %740 = vmatpush1.msra.mxu0 0.0
    %741 = vmatprep.subr.mxu0 0.0
    %742 = vmatpush1.msra.mxu0 0.0
    %743 = vmatprep.subr.mxu0 0.0
    %744 = vmatpush1.msra.mxu0 0.0
    %745 = vmatprep.subr.mxu0 0.0
    %746 = vmatpush1.msra.mxu0 0.0
    %747 = vmatprep.subr.mxu0 0.0
    %748 = vmatpush1.msra.mxu0 0.0
    %749 = vmatprep.subr.mxu0 0.0
    %750 = vmatpush1.msra.mxu0 0.0
    %751 = vmatprep.subr.mxu0 0.0
    %752 = vmatpush1.msra.mxu0 0.0
    %753 = vmatprep.subr.mxu0 0.0
    %754 = vmatpush1.msra.mxu0 0.0
    %755 = vmatprep.subr.mxu0 0.0
    %756 = vmatpush1.msra.mxu0 0.0
    %757 = vmatprep.subr.mxu0 0.0
    %758 = vmatpush1.msra.mxu0 0.0
    %759 = vmatprep.subr.mxu0 0.0
    %760 = vmatpush1.msra.mxu0 0.0
    %761 = vmatprep.subr.mxu0 0.0
    %762 = vmatpush1.msra.mxu0 0.0
    %763 = vmatprep.subr.mxu0 0.0
    %764 = vmatpush1.msra.mxu0 0.0
    %765 = vmatprep.subr.mxu0 0.0
    %766 = vmatpush1.msra.mxu0 0.0
    %767 = vmatprep.subr.mxu0 0.0
    %768 = vmatpush1.msra.mxu0 0.0
    %769 = vmatprep.subr.mxu0 0.0
    %770 = vmatpush1.msra.mxu0 0.0
    %771 = vmatprep.subr.mxu0 0.0
    %772 = vmatpush1.msra.mxu0 0.0
    %773 = vmatprep.subr.mxu0 0.0
    %774 = vmatpush1.msra.mxu0 0.0
    %775 = vmatprep.subr.mxu0 0.0
    %776 = vmatpush1.msra.mxu0 0.0
    %777 = vmatprep.subr.mxu0 0.0
    %778 = vmatpush1.msra.mxu0 0.0
    %779 = vmatprep.subr.mxu0 0.0
    %780 = vmatpush1.msra.mxu0 0.0
    %781 = vmatprep.subr.mxu0 0.0
    %782 = vmatpush1.msra.mxu0 0.0
    %783 = vmatprep.subr.mxu0 0.0
    %784 = vmatpush1.msra.mxu0 0.0
    %785 = vmatprep.mubr.f32.mxu0 0.0
    %786 = vmatmul.mubr.f32.gmra.mrb[0].mxu0 %v161
    %v787 = vpop.f32.mrb[0].mxu0
    %v788 = vadd.f32 %v684, %v787
    %v789 = vpop.f32.mrb[0].mxu0
    %v790 = vadd.f32 %v684, %v789
    %791 = vmatprep.mubr.f32.mxu0 0.0
    %792 = vmatmul.mubr.f32.gmra.mrb[0].mxu0 %v164
    %v793 = vpop.f32.mrb[0].mxu0
    %v794 = vadd.f32 %v689, %v793
    %v795 = vpop.f32.mrb[0].mxu0
    %v796 = vadd.f32 %v689, %v795
    %797 = vmatprep.mubr.f32.mxu0 0.0
    %798 = vmatmul.mubr.f32.gmra.mrb[0].mxu0 %v167
    %v799 = vpop.f32.mrb[0].mxu0
    %v800 = vadd.f32 %v694, %v799
    %v801 = vpop.f32.mrb[0].mxu0
    %v802 = vadd.f32 %v694, %v801
    %803 = vmatprep.mubr.f32.mxu0 0.0
    %804 = vmatmul.mubr.f32.gmra.mrb[0].mxu0 %v170
    %v805 = vpop.f32.mrb[0].mxu0
    %v806 = vadd.f32 %v699, %v805
    %v807 = vpop.f32.mrb[0].mxu0
    %v808 = vadd.f32 %v699, %v807
    %809 = vmatprep.mubr.f32.mxu0 0.0
    %810 = vmatmul.mubr.f32.gmra.mrb[0].mxu0 %v173
    %v811 = vpop.f32.mrb[0].mxu0
    %v812 = vadd.f32 %v704, %v811
    %v813 = vpop.f32.mrb[0].mxu0
    %v814 = vadd.f32 %v704, %v813
    %815 = vmatprep.mubr.f32.mxu0 0.0
    %816 = vmatmul.mubr.f32.gmra.mrb[0].mxu0 %v176
    %v817 = vpop.f32.mrb[0].mxu0
    %v818 = vadd.f32 %v709, %v817
    %v819 = vpop.f32.mrb[0].mxu0
    %v820 = vadd.f32 %v709, %v819
    %821 = vmatprep.mubr.f32.mxu0 0.0
    %822 = vmatmul.mubr.f32.gmra.mrb[0].mxu0 %v179
    %v823 = vpop.f32.mrb[0].mxu0
    %v824 = vadd.f32 %v714, %v823
    %v825 = vpop.f32.mrb[0].mxu0
    %v826 = vadd.f32 %v714, %v825
    %827 = vmatprep.mubr.f32.mxu0 0.0
    %828 = vmatmul.mubr.f32.gmra.mrb[0].mxu0 %v182
    %v829 = vpop.f32.mrb[0].mxu0
    %v830 = vadd.f32 %v719, %v829
    %v831 = vpop.f32.mrb[0].mxu0
    %v832 = vadd.f32 %v719, %v831
    %833 = vdwg.mxu0
    %v834 = vtanh.pop %v788
    %v835 = vtanh.pop %v790
    %v836 = vtanh.pop %v794
    %v837 = vtanh.pop %v796
    %v838 = vtanh.pop %v800
    %v839 = vtanh.pop %v802
    %v840 = vtanh.pop %v806
    %v841 = vtanh.pop %v808
    %v842 = vtanh.pop %v812
    %v843 = vtanh.pop %v814
    %v844 = vtanh.pop %v818
    %v845 = vtanh.pop %v820
    %v846 = vtanh.pop %v824
    %v847 = vtanh.pop %v826
    %v848 = vtanh.pop %v830
    %v849 = vtanh.pop %v832
    %s850 = scalar_lea.vmem [#allocation9], 16
    %v851 = vld [vmem:[%s850] sm:$0xff]
    %v853 = vsel %vm314, %v851, 0
    %855 = vmatprep.subr.mxu0 %v835
    %856 = vmatpush1.msra.mxu0 %v834
    %857 = vmatprep.subr.mxu0 %v837
    %858 = vmatpush1.msra.mxu0 %v836
    %859 = vmatprep.subr.mxu0 %v839
    %860 = vmatpush1.msra.mxu0 %v838
    %861 = vmatprep.subr.mxu0 %v841
    %862 = vmatpush1.msra.mxu0 %v840
    %863 = vmatprep.subr.mxu0 %v843
    %864 = vmatpush1.msra.mxu0 %v842
    %865 = vmatprep.subr.mxu0 %v845
    %866 = vmatpush1.msra.mxu0 %v844
    %867 = vmatprep.subr.mxu0 %v847
    %868 = vmatpush1.msra.mxu0 %v846
    %869 = vmatprep.subr.mxu0 %v849
    %870 = vmatpush1.msra.mxu0 %v848
    %871 = vmatprep.subr.mxu0 0.0
    %872 = vmatpush1.msra.mxu0 0.0
    %873 = vmatprep.subr.mxu0 0.0
    %874 = vmatpush1.msra.mxu0 0.0
    %875 = vmatprep.subr.mxu0 0.0
    %876 = vmatpush1.msra.mxu0 0.0
    %877 = vmatprep.subr.mxu0 0.0
    %878 = vmatpush1.msra.mxu0 0.0
    %879 = vmatprep.subr.mxu0 0.0
    %880 = vmatpush1.msra.mxu0 0.0
    %881 = vmatprep.subr.mxu0 0.0
    %882 = vmatpush1.msra.mxu0 0.0
    %883 = vmatprep.subr.mxu0 0.0
    %884 = vmatpush1.msra.mxu0 0.0
    %885 = vmatprep.subr.mxu0 0.0
    %886 = vmatpush1.msra.mxu0 0.0
    %887 = vmatprep.subr.mxu0 0.0
    %888 = vmatpush1.msra.mxu0 0.0
    %889 = vmatprep.subr.mxu0 0.0
    %890 = vmatpush1.msra.mxu0 0.0
    %891 = vmatprep.subr.mxu0 0.0
    %892 = vmatpush1.msra.mxu0 0.0
    %893 = vmatprep.subr.mxu0 0.0
    %894 = vmatpush1.msra.mxu0 0.0
    %895 = vmatprep.subr.mxu0 0.0
    %896 = vmatpush1.msra.mxu0 0.0
    %897 = vmatprep.subr.mxu0 0.0
    %898 = vmatpush1.msra.mxu0 0.0
    %899 = vmatprep.subr.mxu0 0.0
    %900 = vmatpush1.msra.mxu0 0.0
    %901 = vmatprep.subr.mxu0 0.0
    %902 = vmatpush1.msra.mxu0 0.0
    %903 = vmatprep.subr.mxu0 0.0
    %904 = vmatpush1.msra.mxu0 0.0
    %905 = vmatprep.subr.mxu0 0.0
    %906 = vmatpush1.msra.mxu0 0.0
    %907 = vmatprep.subr.mxu0 0.0
    %908 = vmatpush1.msra.mxu0 0.0
    %909 = vmatprep.subr.mxu0 0.0
    %910 = vmatpush1.msra.mxu0 0.0
    %911 = vmatprep.subr.mxu0 0.0
    %912 = vmatpush1.msra.mxu0 0.0
    %913 = vmatprep.subr.mxu0 0.0
    %914 = vmatpush1.msra.mxu0 0.0
    %915 = vmatprep.subr.mxu0 0.0
    %916 = vmatpush1.msra.mxu0 0.0
    %917 = vmatprep.subr.mxu0 0.0
    %918 = vmatpush1.msra.mxu0 0.0
    %919 = vmatprep.mubr.f32.mxu0 0.0
    %920 = vmatmul.mubr.f32.gmra.mrb[0].mxu0 %v853
    %v921 = vpop.f32.mrb[0].mxu0
    %v922 = vadd.f32 0.0, %v921
    %v923 = vpop.f32.mrb[0].mxu0
    %v924 = vadd.f32 0.0, %v923
    %925 = vdwg.mxu0
    %s926 = sld [smem:[#allocation2 + $0x2]]
    %v927 = vstv %s926
    %v928 = vmul.f32 %v927, %v670
    %v929 = vmul.f32 %v927, %v671
    %v930 = vadd.f32 %v928, %v922
    %v931 = vadd.f32 %v929, %v924
    %s932 = scalar_lea.vmem [#allocation10], 16
    %v933 = vld [vmem:[%s932] sm:$0xff]
    %935 = vset.pattern.permute.xlu0 0
    %936 = vperm.xlu0 %935, %v933
    %v937 = vpop.permute.xlu0 %936
    %v939 = vadd.f32 %v930, %v937
    %v940 = vadd.f32 %v931, %v937
    %s941 = scalar_lea.vmem [#allocation12], 192
    %v942 = vld [vmem:[%s941] sm:$0xff]
    %v943 = vld [vmem:[%s941 + $0x8] sm:$0xff]
    %v944 = vld [vmem:[%s941 + $0x10] sm:$0xff]
    %v945 = vld [vmem:[%s941 + $0x18] sm:$0xff]
    %v946 = vld [vmem:[%s941 + $0x20] sm:$0xff]
    %v947 = vld [vmem:[%s941 + $0x28] sm:$0xff]
    %v948 = vld [vmem:[%s941 + $0x30] sm:$0xff]
    %v949 = vld [vmem:[%s941 + $0x38] sm:$0xff]
    %951 = vset.pattern.permute.xlu0 0
    %952 = vperm.xlu0 %951, %v942
    %v953 = vpop.permute.xlu0 %952
    %956 = vset.pattern.permute.xlu0 0
    %957 = vperm.xlu0 %956, %v943
    %v958 = vpop.permute.xlu0 %957
    %961 = vset.pattern.permute.xlu0 0
    %962 = vperm.xlu0 %961, %v944
    %v963 = vpop.permute.xlu0 %962
    %966 = vset.pattern.permute.xlu0 0
    %967 = vperm.xlu0 %966, %v945
    %v968 = vpop.permute.xlu0 %967
    %971 = vset.pattern.permute.xlu0 0
    %972 = vperm.xlu0 %971, %v946
    %v973 = vpop.permute.xlu0 %972
    %976 = vset.pattern.permute.xlu0 0
    %977 = vperm.xlu0 %976, %v947
    %v978 = vpop.permute.xlu0 %977
    %981 = vset.pattern.permute.xlu0 0
    %982 = vperm.xlu0 %981, %v948
    %v983 = vpop.permute.xlu0 %982
    %986 = vset.pattern.permute.xlu0 0
    %987 = vperm.xlu0 %986, %v949
    %v988 = vpop.permute.xlu0 %987
    %990 = vmatprep.subr.mxu0 %v940
    %991 = vmatpush1.msra.mxu0 %v939
    %992 = vmatprep.subr.mxu0 0.0
    %993 = vmatpush1.msra.mxu0 0.0
    %994 = vmatprep.subr.mxu0 0.0
    %995 = vmatpush1.msra.mxu0 0.0
    %996 = vmatprep.subr.mxu0 0.0
    %997 = vmatpush1.msra.mxu0 0.0
    %998 = vmatprep.subr.mxu0 0.0
    %999 = vmatpush1.msra.mxu0 0.0
    %1000 = vmatprep.subr.mxu0 0.0
    %1001 = vmatpush1.msra.mxu0 0.0
    %1002 = vmatprep.subr.mxu0 0.0
    %1003 = vmatpush1.msra.mxu0 0.0
    %1004 = vmatprep.subr.mxu0 0.0
    %1005 = vmatpush1.msra.mxu0 0.0
    %1006 = vmatprep.subr.mxu0 0.0
    %1007 = vmatpush1.msra.mxu0 0.0
    %1008 = vmatprep.subr.mxu0 0.0
    %1009 = vmatpush1.msra.mxu0 0.0
    %1010 = vmatprep.subr.mxu0 0.0
    %1011 = vmatpush1.msra.mxu0 0.0
    %1012 = vmatprep.subr.mxu0 0.0
    %1013 = vmatpush1.msra.mxu0 0.0
    %1014 = vmatprep.subr.mxu0 0.0
    %1015 = vmatpush1.msra.mxu0 0.0
    %1016 = vmatprep.subr.mxu0 0.0
    %1017 = vmatpush1.msra.mxu0 0.0
    %1018 = vmatprep.subr.mxu0 0.0
    %1019 = vmatpush1.msra.mxu0 0.0
    %1020 = vmatprep.subr.mxu0 0.0
    %1021 = vmatpush1.msra.mxu0 0.0
    %1022 = vmatprep.subr.mxu0 0.0
    %1023 = vmatpush1.msra.mxu0 0.0
    %1024 = vmatprep.subr.mxu0 0.0
    %1025 = vmatpush1.msra.mxu0 0.0
    %1026 = vmatprep.subr.mxu0 0.0
    %1027 = vmatpush1.msra.mxu0 0.0
    %1028 = vmatprep.subr.mxu0 0.0
    %1029 = vmatpush1.msra.mxu0 0.0
    %1030 = vmatprep.subr.mxu0 0.0
    %1031 = vmatpush1.msra.mxu0 0.0
    %1032 = vmatprep.subr.mxu0 0.0
    %1033 = vmatpush1.msra.mxu0 0.0
    %1034 = vmatprep.subr.mxu0 0.0
    %1035 = vmatpush1.msra.mxu0 0.0
    %1036 = vmatprep.subr.mxu0 0.0
    %1037 = vmatpush1.msra.mxu0 0.0
    %1038 = vmatprep.subr.mxu0 0.0
    %1039 = vmatpush1.msra.mxu0 0.0
    %1040 = vmatprep.subr.mxu0 0.0
    %1041 = vmatpush1.msra.mxu0 0.0
    %1042 = vmatprep.subr.mxu0 0.0
    %1043 = vmatpush1.msra.mxu0 0.0
    %1044 = vmatprep.subr.mxu0 0.0
    %1045 = vmatpush1.msra.mxu0 0.0
    %1046 = vmatprep.subr.mxu0 0.0
    %1047 = vmatpush1.msra.mxu0 0.0
    %1048 = vmatprep.subr.mxu0 0.0
    %1049 = vmatpush1.msra.mxu0 0.0
    %1050 = vmatprep.subr.mxu0 0.0
    %1051 = vmatpush1.msra.mxu0 0.0
    %1052 = vmatprep.subr.mxu0 0.0
    %1053 = vmatpush1.msra.mxu0 0.0
    %1054 = vmatprep.mubr.f32.mxu0 0.0
    %1055 = vmatmul.mubr.f32.gmra.mrb[0].mxu0 %v161
    %v1056 = vpop.f32.mrb[0].mxu0
    %v1057 = vadd.f32 %v953, %v1056
    %v1058 = vpop.f32.mrb[0].mxu0
    %v1059 = vadd.f32 %v953, %v1058
    %1060 = vmatprep.mubr.f32.mxu0 0.0
    %1061 = vmatmul.mubr.f32.gmra.mrb[0].mxu0 %v164
    %v1062 = vpop.f32.mrb[0].mxu0
    %v1063 = vadd.f32 %v958, %v1062
    %v1064 = vpop.f32.mrb[0].mxu0
    %v1065 = vadd.f32 %v958, %v1064
    %1066 = vmatprep.mubr.f32.mxu0 0.0
    %1067 = vmatmul.mubr.f32.gmra.mrb[0].mxu0 %v167
    %v1068 = vpop.f32.mrb[0].mxu0
    %v1069 = vadd.f32 %v963, %v1068
    %v1070 = vpop.f32.mrb[0].mxu0
    %v1071 = vadd.f32 %v963, %v1070
    %1072 = vmatprep.mubr.f32.mxu0 0.0
    %1073 = vmatmul.mubr.f32.gmra.mrb[0].mxu0 %v170
    %v1074 = vpop.f32.mrb[0].mxu0
    %v1075 = vadd.f32 %v968, %v1074
    %v1076 = vpop.f32.mrb[0].mxu0
    %v1077 = vadd.f32 %v968, %v1076
    %1078 = vmatprep.mubr.f32.mxu0 0.0
    %1079 = vmatmul.mubr.f32.gmra.mrb[0].mxu0 %v173
    %v1080 = vpop.f32.mrb[0].mxu0
    %v1081 = vadd.f32 %v973, %v1080
    %v1082 = vpop.f32.mrb[0].mxu0
    %v1083 = vadd.f32 %v973, %v1082
    %1084 = vmatprep.mubr.f32.mxu0 0.0
    %1085 = vmatmul.mubr.f32.gmra.mrb[0].mxu0 %v176
    %v1086 = vpop.f32.mrb[0].mxu0
    %v1087 = vadd.f32 %v978, %v1086
    %v1088 = vpop.f32.mrb[0].mxu0
    %v1089 = vadd.f32 %v978, %v1088
    %1090 = vmatprep.mubr.f32.mxu0 0.0
    %1091 = vmatmul.mubr.f32.gmra.mrb[0].mxu0 %v179
    %v1092 = vpop.f32.mrb[0].mxu0
    %v1093 = vadd.f32 %v983, %v1092
    %v1094 = vpop.f32.mrb[0].mxu0
    %v1095 = vadd.f32 %v983, %v1094
    %1096 = vmatprep.mubr.f32.mxu0 0.0
    %1097 = vmatmul.mubr.f32.gmra.mrb[0].mxu0 %v182
    %v1098 = vpop.f32.mrb[0].mxu0
    %v1099 = vadd.f32 %v988, %v1098
    %v1100 = vpop.f32.mrb[0].mxu0
    %v1101 = vadd.f32 %v988, %v1100
    %1102 = vdwg.mxu0
    %v1103 = vtanh.pop %v1057
    %v1104 = vtanh.pop %v1059
    %v1105 = vtanh.pop %v1063
    %v1106 = vtanh.pop %v1065
    %v1107 = vtanh.pop %v1069
    %v1108 = vtanh.pop %v1071
    %v1109 = vtanh.pop %v1075
    %v1110 = vtanh.pop %v1077
    %v1111 = vtanh.pop %v1081
    %v1112 = vtanh.pop %v1083
    %v1113 = vtanh.pop %v1087
    %v1114 = vtanh.pop %v1089
    %v1115 = vtanh.pop %v1093
    %v1116 = vtanh.pop %v1095
    %v1117 = vtanh.pop %v1099
    %v1118 = vtanh.pop %v1101
    %s1119 = scalar_lea.vmem [#allocation9], 24
    %v1120 = vld [vmem:[%s1119] sm:$0xff]
    %v1122 = vsel %vm314, %v1120, 0
    %1124 = vmatprep.subr.mxu0 %v1104
    %1125 = vmatpush1.msra.mxu0 %v1103
    %1126 = vmatprep.subr.mxu0 %v1106
    %1127 = vmatpush1.msra.mxu0 %v1105
    %1128 = vmatprep.subr.mxu0 %v1108
    %1129 = vmatpush1.msra.mxu0 %v1107
    %1130 = vmatprep.subr.mxu0 %v1110
    %1131 = vmatpush1.msra.mxu0 %v1109
    %1132 = vmatprep.subr.mxu0 %v1112
    %1133 = vmatpush1.msra.mxu0 %v1111
    %1134 = vmatprep.subr.mxu0 %v1114
    %1135 = vmatpush1.msra.mxu0 %v1113
    %1136 = vmatprep.subr.mxu0 %v1116
    %1137 = vmatpush1.msra.mxu0 %v1115
    %1138 = vmatprep.subr.mxu0 %v1118
    %1139 = vmatpush1.msra.mxu0 %v1117
    %1140 = vmatprep.subr.mxu0 0.0
    %1141 = vmatpush1.msra.mxu0 0.0
    %1142 = vmatprep.subr.mxu0 0.0
    %1143 = vmatpush1.msra.mxu0 0.0
    %1144 = vmatprep.subr.mxu0 0.0
    %1145 = vmatpush1.msra.mxu0 0.0
    %1146 = vmatprep.subr.mxu0 0.0
    %1147 = vmatpush1.msra.mxu0 0.0
    %1148 = vmatprep.subr.mxu0 0.0
    %1149 = vmatpush1.msra.mxu0 0.0
    %1150 = vmatprep.subr.mxu0 0.0
    %1151 = vmatpush1.msra.mxu0 0.0
    %1152 = vmatprep.subr.mxu0 0.0
    %1153 = vmatpush1.msra.mxu0 0.0
    %1154 = vmatprep.subr.mxu0 0.0
    %1155 = vmatpush1.msra.mxu0 0.0
    %1156 = vmatprep.subr.mxu0 0.0
    %1157 = vmatpush1.msra.mxu0 0.0
    %1158 = vmatprep.subr.mxu0 0.0
    %1159 = vmatpush1.msra.mxu0 0.0
    %1160 = vmatprep.subr.mxu0 0.0
    %1161 = vmatpush1.msra.mxu0 0.0
    %1162 = vmatprep.subr.mxu0 0.0
    %1163 = vmatpush1.msra.mxu0 0.0
    %1164 = vmatprep.subr.mxu0 0.0
    %1165 = vmatpush1.msra.mxu0 0.0
    %1166 = vmatprep.subr.mxu0 0.0
    %1167 = vmatpush1.msra.mxu0 0.0
    %1168 = vmatprep.subr.mxu0 0.0
    %1169 = vmatpush1.msra.mxu0 0.0
    %1170 = vmatprep.subr.mxu0 0.0
    %1171 = vmatpush1.msra.mxu0 0.0
    %1172 = vmatprep.subr.mxu0 0.0
    %1173 = vmatpush1.msra.mxu0 0.0
    %1174 = vmatprep.subr.mxu0 0.0
    %1175 = vmatpush1.msra.mxu0 0.0
    %1176 = vmatprep.subr.mxu0 0.0
    %1177 = vmatpush1.msra.mxu0 0.0
    %1178 = vmatprep.subr.mxu0 0.0
    %1179 = vmatpush1.msra.mxu0 0.0
    %1180 = vmatprep.subr.mxu0 0.0
    %1181 = vmatpush1.msra.mxu0 0.0
    %1182 = vmatprep.subr.mxu0 0.0
    %1183 = vmatpush1.msra.mxu0 0.0
    %1184 = vmatprep.subr.mxu0 0.0
    %1185 = vmatpush1.msra.mxu0 0.0
    %1186 = vmatprep.subr.mxu0 0.0
    %1187 = vmatpush1.msra.mxu0 0.0
    %1188 = vmatprep.mubr.f32.mxu0 0.0
    %1189 = vmatmul.mubr.f32.gmra.mrb[0].mxu0 %v1122
    %v1190 = vpop.f32.mrb[0].mxu0
    %v1191 = vadd.f32 0.0, %v1190
    %v1192 = vpop.f32.mrb[0].mxu0
    %v1193 = vadd.f32 0.0, %v1192
    %1194 = vdwg.mxu0
    %s1195 = sld [smem:[#allocation2 + $0x3]]
    %v1196 = vstv %s1195
    %v1197 = vmul.f32 %v1196, %v939
    %v1198 = vmul.f32 %v1196, %v940
    %v1199 = vadd.f32 %v1197, %v1191
    %v1200 = vadd.f32 %v1198, %v1193
    %s1201 = scalar_lea.vmem [#allocation10], 24
    %v1202 = vld [vmem:[%s1201] sm:$0xff]
    %1204 = vset.pattern.permute.xlu0 0
    %1205 = vperm.xlu0 %1204, %v1202
    %v1206 = vpop.permute.xlu0 %1205
    %v1208 = vadd.f32 %v1199, %v1206
    %v1209 = vadd.f32 %v1200, %v1206
    %s1210 = scalar_lea.vmem [#allocation12], 256
    %v1211 = vld [vmem:[%s1210] sm:$0xff]
    %v1212 = vld [vmem:[%s1210 + $0x8] sm:$0xff]
    %v1213 = vld [vmem:[%s1210 + $0x10] sm:$0xff]
    %v1214 = vld [vmem:[%s1210 + $0x18] sm:$0xff]
    %v1215 = vld [vmem:[%s1210 + $0x20] sm:$0xff]
    %v1216 = vld [vmem:[%s1210 + $0x28] sm:$0xff]
    %v1217 = vld [vmem:[%s1210 + $0x30] sm:$0xff]
    %v1218 = vld [vmem:[%s1210 + $0x38] sm:$0xff]
    %1220 = vset.pattern.permute.xlu0 0
    %1221 = vperm.xlu0 %1220, %v1211
    %v1222 = vpop.permute.xlu0 %1221
    %1225 = vset.pattern.permute.xlu0 0
    %1226 = vperm.xlu0 %1225, %v1212
    %v1227 = vpop.permute.xlu0 %1226
    %1230 = vset.pattern.permute.xlu0 0
    %1231 = vperm.xlu0 %1230, %v1213
    %v1232 = vpop.permute.xlu0 %1231
    %1235 = vset.pattern.permute.xlu0 0
    %1236 = vperm.xlu0 %1235, %v1214
    %v1237 = vpop.permute.xlu0 %1236
    %1240 = vset.pattern.permute.xlu0 0
    %1241 = vperm.xlu0 %1240, %v1215
    %v1242 = vpop.permute.xlu0 %1241
    %1245 = vset.pattern.permute.xlu0 0
    %1246 = vperm.xlu0 %1245, %v1216
    %v1247 = vpop.permute.xlu0 %1246
    %1250 = vset.pattern.permute.xlu0 0
    %1251 = vperm.xlu0 %1250, %v1217
    %v1252 = vpop.permute.xlu0 %1251
    %1255 = vset.pattern.permute.xlu0 0
    %1256 = vperm.xlu0 %1255, %v1218
    %v1257 = vpop.permute.xlu0 %1256
    %1259 = vmatprep.subr.mxu0 %v1209
    %1260 = vmatpush1.msra.mxu0 %v1208
    %1261 = vmatprep.subr.mxu0 0.0
    %1262 = vmatpush1.msra.mxu0 0.0
    %1263 = vmatprep.subr.mxu0 0.0
    %1264 = vmatpush1.msra.mxu0 0.0
    %1265 = vmatprep.subr.mxu0 0.0
    %1266 = vmatpush1.msra.mxu0 0.0
    %1267 = vmatprep.subr.mxu0 0.0
    %1268 = vmatpush1.msra.mxu0 0.0
    %1269 = vmatprep.subr.mxu0 0.0
    %1270 = vmatpush1.msra.mxu0 0.0
    %1271 = vmatprep.subr.mxu0 0.0
    %1272 = vmatpush1.msra.mxu0 0.0
    %1273 = vmatprep.subr.mxu0 0.0
    %1274 = vmatpush1.msra.mxu0 0.0
    %1275 = vmatprep.subr.mxu0 0.0
    %1276 = vmatpush1.msra.mxu0 0.0
    %1277 = vmatprep.subr.mxu0 0.0
    %1278 = vmatpush1.msra.mxu0 0.0
    %1279 = vmatprep.subr.mxu0 0.0
    %1280 = vmatpush1.msra.mxu0 0.0
    %1281 = vmatprep.subr.mxu0 0.0
    %1282 = vmatpush1.msra.mxu0 0.0
    %1283 = vmatprep.subr.mxu0 0.0
    %1284 = vmatpush1.msra.mxu0 0.0
    %1285 = vmatprep.subr.mxu0 0.0
    %1286 = vmatpush1.msra.mxu0 0.0
    %1287 = vmatprep.subr.mxu0 0.0
    %1288 = vmatpush1.msra.mxu0 0.0
    %1289 = vmatprep.subr.mxu0 0.0
    %1290 = vmatpush1.msra.mxu0 0.0
    %1291 = vmatprep.subr.mxu0 0.0
    %1292 = vmatpush1.msra.mxu0 0.0
    %1293 = vmatprep.subr.mxu0 0.0
    %1294 = vmatpush1.msra.mxu0 0.0
    %1295 = vmatprep.subr.mxu0 0.0
    %1296 = vmatpush1.msra.mxu0 0.0
    %1297 = vmatprep.subr.mxu0 0.0
    %1298 = vmatpush1.msra.mxu0 0.0
    %1299 = vmatprep.subr.mxu0 0.0
    %1300 = vmatpush1.msra.mxu0 0.0
    %1301 = vmatprep.subr.mxu0 0.0
    %1302 = vmatpush1.msra.mxu0 0.0
    %1303 = vmatprep.subr.mxu0 0.0
    %1304 = vmatpush1.msra.mxu0 0.0
    %1305 = vmatprep.subr.mxu0 0.0
    %1306 = vmatpush1.msra.mxu0 0.0
    %1307 = vmatprep.subr.mxu0 0.0
    %1308 = vmatpush1.msra.mxu0 0.0
    %1309 = vmatprep.subr.mxu0 0.0
    %1310 = vmatpush1.msra.mxu0 0.0
    %1311 = vmatprep.subr.mxu0 0.0
    %1312 = vmatpush1.msra.mxu0 0.0
    %1313 = vmatprep.subr.mxu0 0.0
    %1314 = vmatpush1.msra.mxu0 0.0
    %1315 = vmatprep.subr.mxu0 0.0
    %1316 = vmatpush1.msra.mxu0 0.0
    %1317 = vmatprep.subr.mxu0 0.0
    %1318 = vmatpush1.msra.mxu0 0.0
    %1319 = vmatprep.subr.mxu0 0.0
    %1320 = vmatpush1.msra.mxu0 0.0
    %1321 = vmatprep.subr.mxu0 0.0
    %1322 = vmatpush1.msra.mxu0 0.0
    %1323 = vmatprep.mubr.f32.mxu0 0.0
    %1324 = vmatmul.mubr.f32.gmra.mrb[0].mxu0 %v161
    %v1325 = vpop.f32.mrb[0].mxu0
    %v1326 = vadd.f32 %v1222, %v1325
    %v1327 = vpop.f32.mrb[0].mxu0
    %v1328 = vadd.f32 %v1222, %v1327
    %1329 = vmatprep.mubr.f32.mxu0 0.0
    %1330 = vmatmul.mubr.f32.gmra.mrb[0].mxu0 %v164
    %v1331 = vpop.f32.mrb[0].mxu0
    %v1332 = vadd.f32 %v1227, %v1331
    %v1333 = vpop.f32.mrb[0].mxu0
    %v1334 = vadd.f32 %v1227, %v1333
    %1335 = vmatprep.mubr.f32.mxu0 0.0
    %1336 = vmatmul.mubr.f32.gmra.mrb[0].mxu0 %v167
    %v1337 = vpop.f32.mrb[0].mxu0
    %v1338 = vadd.f32 %v1232, %v1337
    %v1339 = vpop.f32.mrb[0].mxu0
    %v1340 = vadd.f32 %v1232, %v1339
    %1341 = vmatprep.mubr.f32.mxu0 0.0
    %1342 = vmatmul.mubr.f32.gmra.mrb[0].mxu0 %v170
    %v1343 = vpop.f32.mrb[0].mxu0
    %v1344 = vadd.f32 %v1237, %v1343
    %v1345 = vpop.f32.mrb[0].mxu0
    %v1346 = vadd.f32 %v1237, %v1345
    %1347 = vmatprep.mubr.f32.mxu0 0.0
    %1348 = vmatmul.mubr.f32.gmra.mrb[0].mxu0 %v173
    %v1349 = vpop.f32.mrb[0].mxu0
    %v1350 = vadd.f32 %v1242, %v1349
    %v1351 = vpop.f32.mrb[0].mxu0
    %v1352 = vadd.f32 %v1242, %v1351
    %1353 = vmatprep.mubr.f32.mxu0 0.0
    %1354 = vmatmul.mubr.f32.gmra.mrb[0].mxu0 %v176
    %v1355 = vpop.f32.mrb[0].mxu0
    %v1356 = vadd.f32 %v1247, %v1355
    %v1357 = vpop.f32.mrb[0].mxu0
    %v1358 = vadd.f32 %v1247, %v1357
    %1359 = vmatprep.mubr.f32.mxu0 0.0
    %1360 = vmatmul.mubr.f32.gmra.mrb[0].mxu0 %v179
    %v1361 = vpop.f32.mrb[0].mxu0
    %v1362 = vadd.f32 %v1252, %v1361
    %v1363 = vpop.f32.mrb[0].mxu0
    %v1364 = vadd.f32 %v1252, %v1363
    %1365 = vmatprep.mubr.f32.mxu0 0.0
    %1366 = vmatmul.mubr.f32.gmra.mrb[0].mxu0 %v182
    %v1367 = vpop.f32.mrb[0].mxu0
    %v1368 = vadd.f32 %v1257, %v1367
    %v1369 = vpop.f32.mrb[0].mxu0
    %v1370 = vadd.f32 %v1257, %v1369
    %1371 = vdwg.mxu0
    %v1372 = vtanh.pop %v1326
    %v1373 = vtanh.pop %v1328
    %v1374 = vtanh.pop %v1332
    %v1375 = vtanh.pop %v1334
    %v1376 = vtanh.pop %v1338
    %v1377 = vtanh.pop %v1340
    %v1378 = vtanh.pop %v1344
    %v1379 = vtanh.pop %v1346
    %v1380 = vtanh.pop %v1350
    %v1381 = vtanh.pop %v1352
    %v1382 = vtanh.pop %v1356
    %v1383 = vtanh.pop %v1358
    %v1384 = vtanh.pop %v1362
    %v1385 = vtanh.pop %v1364
    %v1386 = vtanh.pop %v1368
    %v1387 = vtanh.pop %v1370
    %s1388 = scalar_lea.vmem [#allocation9], 32
    %v1389 = vld [vmem:[%s1388] sm:$0xff]
    %v1391 = vsel %vm314, %v1389, 0
    %1393 = vmatprep.subr.mxu0 %v1373
    %1394 = vmatpush1.msra.mxu0 %v1372
    %1395 = vmatprep.subr.mxu0 %v1375
    %1396 = vmatpush1.msra.mxu0 %v1374
    %1397 = vmatprep.subr.mxu0 %v1377
    %1398 = vmatpush1.msra.mxu0 %v1376
    %1399 = vmatprep.subr.mxu0 %v1379
    %1400 = vmatpush1.msra.mxu0 %v1378
    %1401 = vmatprep.subr.mxu0 %v1381
    %1402 = vmatpush1.msra.mxu0 %v1380
    %1403 = vmatprep.subr.mxu0 %v1383
    %1404 = vmatpush1.msra.mxu0 %v1382
    %1405 = vmatprep.subr.mxu0 %v1385
    %1406 = vmatpush1.msra.mxu0 %v1384
    %1407 = vmatprep.subr.mxu0 %v1387
    %1408 = vmatpush1.msra.mxu0 %v1386
    %1409 = vmatprep.subr.mxu0 0.0
    %1410 = vmatpush1.msra.mxu0 0.0
    %1411 = vmatprep.subr.mxu0 0.0
    %1412 = vmatpush1.msra.mxu0 0.0
    %1413 = vmatprep.subr.mxu0 0.0
    %1414 = vmatpush1.msra.mxu0 0.0
    %1415 = vmatprep.subr.mxu0 0.0
    %1416 = vmatpush1.msra.mxu0 0.0
    %1417 = vmatprep.subr.mxu0 0.0
    %1418 = vmatpush1.msra.mxu0 0.0
    %1419 = vmatprep.subr.mxu0 0.0
    %1420 = vmatpush1.msra.mxu0 0.0
    %1421 = vmatprep.subr.mxu0 0.0
    %1422 = vmatpush1.msra.mxu0 0.0
    %1423 = vmatprep.subr.mxu0 0.0
    %1424 = vmatpush1.msra.mxu0 0.0
    %1425 = vmatprep.subr.mxu0 0.0
    %1426 = vmatpush1.msra.mxu0 0.0
    %1427 = vmatprep.subr.mxu0 0.0
    %1428 = vmatpush1.msra.mxu0 0.0
    %1429 = vmatprep.subr.mxu0 0.0
    %1430 = vmatpush1.msra.mxu0 0.0
    %1431 = vmatprep.subr.mxu0 0.0
    %1432 = vmatpush1.msra.mxu0 0.0
    %1433 = vmatprep.subr.mxu0 0.0
    %1434 = vmatpush1.msra.mxu0 0.0
    %1435 = vmatprep.subr.mxu0 0.0
    %1436 = vmatpush1.msra.mxu0 0.0
    %1437 = vmatprep.subr.mxu0 0.0
    %1438 = vmatpush1.msra.mxu0 0.0
    %1439 = vmatprep.subr.mxu0 0.0
    %1440 = vmatpush1.msra.mxu0 0.0
    %1441 = vmatprep.subr.mxu0 0.0
    %1442 = vmatpush1.msra.mxu0 0.0
    %1443 = vmatprep.subr.mxu0 0.0
    %1444 = vmatpush1.msra.mxu0 0.0
    %1445 = vmatprep.subr.mxu0 0.0
    %1446 = vmatpush1.msra.mxu0 0.0
    %1447 = vmatprep.subr.mxu0 0.0
    %1448 = vmatpush1.msra.mxu0 0.0
    %1449 = vmatprep.subr.mxu0 0.0
    %1450 = vmatpush1.msra.mxu0 0.0
    %1451 = vmatprep.subr.mxu0 0.0
    %1452 = vmatpush1.msra.mxu0 0.0
    %1453 = vmatprep.subr.mxu0 0.0
    %1454 = vmatpush1.msra.mxu0 0.0
    %1455 = vmatprep.subr.mxu0 0.0
    %1456 = vmatpush1.msra.mxu0 0.0
    %1457 = vmatprep.mubr.f32.mxu0 0.0
    %1458 = vmatmul.mubr.f32.gmra.mrb[0].mxu0 %v1391
    %v1459 = vpop.f32.mrb[0].mxu0
    %v1460 = vadd.f32 0.0, %v1459
    %v1461 = vpop.f32.mrb[0].mxu0
    %v1462 = vadd.f32 0.0, %v1461
    %1463 = vdwg.mxu0
    %s1464 = sld [smem:[#allocation2 + $0x4]]
    %v1465 = vstv %s1464
    %v1466 = vmul.f32 %v1465, %v1208
    %v1467 = vmul.f32 %v1465, %v1209
    %v1468 = vadd.f32 %v1466, %v1460
    %v1469 = vadd.f32 %v1467, %v1462
    %s1470 = scalar_lea.vmem [#allocation10], 32
    %v1471 = vld [vmem:[%s1470] sm:$0xff]
    %1473 = vset.pattern.permute.xlu0 0
    %1474 = vperm.xlu0 %1473, %v1471
    %v1475 = vpop.permute.xlu0 %1474
    %v1477 = vadd.f32 %v1468, %v1475
    %v1478 = vadd.f32 %v1469, %v1475
    %1479 = vst [vmem:[#allocation13] sm:$0xff] %v1477
    %1480 = vst [vmem:[#allocation13 + $0x8] sm:$0xff] %v1478
    // Predicated region
    $region50: #{_forward_impl.1} parent=1 // pred_check
      _
    $region51: #{_forward_impl.1} parent=1 // pred_check_branch
      %1482 = sbr.rel (0) target = $region53
    $region52: #{_forward_impl.1} parent=1 // pred_region
      %s1484 = ssub.s32 256, 256
      %1485 = vsyncadd [#allocation4], %s1484
      %s1487 = sshll.u32 [#allocation13], 4
      %s1488 = int_to_ptr.vmem [resolvable:$true] %s1487
      %1490 = dma.vmem_to_hbm [thread:$0]  %s1488, 256, %s6, [#allocation4]
    $region53: #{_forward_impl.1} parent=1 // pred_fallthru
      _
    // Predicated region
    $region54: #{_forward_impl.1} parent=1 // pred_check
      _
    $region55: #{_forward_impl.1} parent=1 // pred_check_branch
      %1492 = sbr.rel (0) target = $region57
    $region56: #{_forward_impl.1} parent=1 // pred_region
      %1493 = dma.done [#allocation4], 256
    $region57: #{_forward_impl.1} parent=1 // pred_fallthru
      _
    %1494 = vsyncpa [#allocation3], 1
    %1495 = vsyncpa [#allocation8], 1
    %1496 = vsyncpa [#allocation11], 1
    %1497 = vsyncpa [#allocation4], 1
    %1498 = vsyncpa [#allocation5], 1

</llo_original>
